<compile_context>
chip_gen: v7x
topology: tpu7x:2x2x1
jax: 0.10.0
libtpu: 0.0.40
codegen_flags: <defaults>
</compile_context>

<pallas_src>
import functools

import jax
import jax.numpy as jnp
from jax.experimental import pallas as pl
from jax.experimental.pallas import tpu as pltpu

KSIZE = 7
PAD = (KSIZE - 1) // 2  # 3


def _spatial_gate_kernel(x_ref, mask_ref, w_ref, bn_ref, o_ref, *, H, W, C,
                         TBC):
    # x_ref   : (TB, C, HW)   VMEM  lane-dense view of TB batch images
    # mask_ref: (14, HW)      VMEM  rows 0..6 : column-edge masks (dc = -3..3)
    #                               rows 7..13: row-edge masks    (dr = -3..3)
    # w_ref   : (98,)         SMEM  conv weights [in_ch, kh, kw]; mean channel
    #                               pre-scaled by 1/C in the wrapper
    # bn_ref  : (2,)          SMEM  folded BatchNorm [scale, bias]
    # o_ref   : (TB, C, HW)   VMEM  output block
    HW = H * W
    TB = x_ref.shape[0]
    nchunks = TB // TBC

    bn_scale = bn_ref[0]
    bn_bias = bn_ref[1]

    def chunk(ci, carry):
        b0 = ci * TBC
        if TBC > 1:
            b0 = pl.multiple_of(b0, TBC)
        rows = pl.ds(b0, TBC)

        # --- ChannelPool: per-channel slices (lane-dense; no full-block f32
        # copy is materialized).  max is exact; mean is a plain sum here
        # because 1/C is folded into the mean-channel conv weights.
        x0 = x_ref[rows, 0, :].astype(jnp.float32)              # (TBC, HW)
        cmax = x0
        csum = x0
        for c in range(1, C):
            xc = x_ref[rows, c, :].astype(jnp.float32)
            cmax = jnp.maximum(cmax, xc)
            csum = csum + xc

        # --- 7x7 conv (2 -> 1 channels, padding 3, no bias) on the flat maps.
        # A shift of (dr*W + dc) on the flat index equals a (dr, dc) image
        # shift; wrapped / row-crossing lanes are killed by the edge masks.
        acc = jnp.zeros((TBC, HW), jnp.float32)
        for ch, src in enumerate((cmax, csum)):
            # 7 column-shifted + column-masked copies (lane rolls -> XLU).
            shifted_cols = []
            for k in range(KSIZE):
                dc = k - PAD
                if dc == 0:
                    shifted_cols.append(src)
                else:
                    s = pltpu.roll(src, (-dc) % HW, axis=1)
                    shifted_cols.append(s * mask_ref[pl.ds(k, 1), :])
            # Per row tap: fuse the 7 column taps (VPU FMAs), then one row
            # roll + row mask.
            for r in range(KSIZE):
                dr = r - PAD
                base = ch * (KSIZE * KSIZE) + r * KSIZE
                u = shifted_cols[0] * w_ref[base]
                for k in range(1, KSIZE):
                    u = u + shifted_cols[k] * w_ref[base + k]
                if dr == 0:
                    acc = acc + u
                else:
                    s = pltpu.roll(u, (-dr * W) % HW, axis=1)
                    acc = acc + s * mask_ref[pl.ds(KSIZE + r, 1), :]

        # --- Folded BatchNorm (eval mode) + numerically stable sigmoid
        # (EUP exp of a non-positive argument only).
        y = acc * bn_scale + bn_bias
        e = jnp.exp(-jnp.abs(y))
        gate = jnp.where(y >= 0.0, 1.0, e) / (1.0 + e)           # (TBC, HW)

        # --- Gated multiply in f32; dense lane-width stores.  Done per input
        # channel with 2-D ops so no (TBC, HW) -> (TBC, 1, HW) relayout is
        # needed, and x_ref is re-read here (bounded live ranges).
        for c in range(C):
            xc = x_ref[rows, c, :].astype(jnp.float32)
            o_ref[rows, c, :] = (xc * gate).astype(o_ref.dtype)
        return carry

    jax.lax.fori_loop(0, nchunks, chunk, 0)


def _choose_tiles(N, C, HW, itemsize):
    """Pick (TB, TBC): batch rows per block / per in-kernel conv chunk."""
    lanes = max(128, -(-HW // 128) * 128)     # (8,128)-tile-padded footprint
    subl = max(8, -(-C // 8) * 8)
    per_img = subl * lanes * itemsize
    budget = 2 * 1024 * 1024                  # per block; x4 (in+out, 2-deep)
    tb = max(1, min(N, budget // max(per_img, 1)))
    if N >= 2:
        # Guarantee >= 2 grid steps so the "parallel" batch axis can shard
        # across v7x's two TensorCores (harmless on v5e/v6e).
        tb = min(tb, max(1, N // 2))
    # Conv chunk size: keep ~11 live (TBC, HW) f32 slabs within the vreg file.
    tbc = max(1, min(8, tb, max(1, 4096 // max(HW, 1))))
    tb = max(tbc, (tb // tbc) * tbc)
    return tb, tbc


def spatial_gate(x, conv_w, bn_gamma, bn_beta, bn_mean, bn_var, eps=1e-5):
    """x: (N, C, H, W).  conv_w: (1, 2, 7, 7).  BN params: scalar or (1,)."""
    N, C, H, W = x.shape
    HW = H * W
    dtype = x.dtype

    # Fold BN running stats (eval mode) into a single scale/bias pair.
    g = jnp.asarray(bn_gamma, jnp.float32).reshape(())
    b = jnp.asarray(bn_beta, jnp.float32).reshape(())
    m = jnp.asarray(bn_mean, jnp.float32).reshape(())
    v = jnp.asarray(bn_var, jnp.float32).reshape(())
    bn_scale = g / jnp.sqrt(v + eps)
    bn = jnp.stack([bn_scale, b - m * bn_scale]).astype(jnp.float32)   # (2,)

    # Conv weights flattened [in_ch, kh, kw]; fold ChannelPool's 1/C into the
    # mean-channel taps so the kernel only needs a channel sum.
    w = jnp.asarray(conv_w, jnp.float32).reshape(2, KSIZE * KSIZE)
    w = w.at[1].multiply(1.0 / C)
    w_flat = w.reshape(-1)                                             # (98,)

    # Precomputed edge masks for the flat-map conv (no div/rem in-kernel).
    col = jnp.arange(HW, dtype=jnp.int32) % W
    row = jnp.arange(HW, dtype=jnp.int32) // W
    masks = []
    for k in range(KSIZE):
        d = k - PAD
        masks.append(((col + d >= 0) & (col + d < W)).astype(jnp.float32))
    for r in range(KSIZE):
        d = r - PAD
        masks.append(((row + d >= 0) & (row + d < H)).astype(jnp.float32))
    masks = jnp.stack(masks)                                           # (14, HW)

    # Batch tiling; pad N so every block is full (non-divisor N supported).
    TB, TBC = _choose_tiles(N, C, HW, dtype.itemsize)
    nsteps = -(-N // TB)
    Np = nsteps * TB
    x3 = x.reshape(N, C, HW)
    if Np != N:
        x3 = jnp.pad(x3, ((0, Np - N), (0, 0), (0, 0)))

    # VMEM estimate including (8,128) tile padding; only raise the scoped
    # limit when the 16 MiB default would not fit (cap 48 MiB: v7x headroom).
    lanes = max(128, -(-HW // 128) * 128)
    subl = max(8, -(-C // 8) * 8)
    block_bytes = TB * subl * lanes * dtype.itemsize
    est_vmem = 4 * block_bytes + 2 * 16 * lanes * 4 + (1 << 20)
    params = dict(dimension_semantics=("parallel",))
    if est_vmem > (16 << 20):
        params["vmem_limit_bytes"] = int(min(est_vmem + (8 << 20), 48 << 20))

    kernel = functools.partial(_spatial_gate_kernel, H=H, W=W, C=C, TBC=TBC)
    out3 = pl.pallas_call(
        kernel,
        out_shape=jax.ShapeDtypeStruct((Np, C, HW), dtype),
        grid=(nsteps,),
        in_specs=[
            pl.BlockSpec((TB, C, HW), lambda n: (n, 0, 0)),
            pl.BlockSpec((2 * KSIZE, HW), lambda n: (0, 0)),
            pl.BlockSpec(memory_space=pltpu.MemorySpace.SMEM),
            pl.BlockSpec(memory_space=pltpu.MemorySpace.SMEM),
        ],
        out_specs=pl.BlockSpec((TB, C, HW), lambda n: (n, 0, 0)),
        compiler_params=pltpu.CompilerParams(**params),
    )(x3, masks, w_flat, bn)
    return out3[:N].reshape(N, C, H, W)


def spatial_gate_reference(x, conv_w, bn_gamma, bn_beta, bn_mean, bn_var,
                           eps=1e-5):
    mx = jnp.max(x, axis=1, keepdims=True)
    mn = jnp.mean(x, axis=1, keepdims=True)
    xc = jnp.concatenate([mx, mn], axis=1)                       # (N, 2, H, W)
    y = jax.lax.conv_general_dilated(
        xc, conv_w, window_strides=(1, 1),
        padding=[(PAD, PAD), (PAD, PAD)],
        dimension_numbers=("NCHW", "OIHW", "NCHW"))
    g = jnp.asarray(bn_gamma, jnp.float32).reshape(())
    b = jnp.asarray(bn_beta, jnp.float32).reshape(())
    m = jnp.asarray(bn_mean, jnp.float32).reshape(())
    v = jnp.asarray(bn_var, jnp.float32).reshape(())
    bn_scale = g / jnp.sqrt(v + eps)
    bn_bias = b - m * bn_scale
    y = y * bn_scale + bn_bias
    return x * jax.nn.sigmoid(y)


if __name__ == "__main__":
    key = jax.random.PRNGKey(0)
    kx, kw = jax.random.split(key)

    N, C, H, W = 2, 4, 16, 16
    x = jax.random.normal(kx, (N, C, H, W), dtype=jnp.float32)

    # Shapes per BasicConv(2, 1, 7, bias=False); BN params as shape-(1,)
    # arrays, the way PyTorch BatchNorm2d(1) provides them.
    conv_w = 0.05 * jax.random.normal(kw, (1, 2, KSIZE, KSIZE),
                                      dtype=jnp.float32)
    bn_gamma = jnp.full((1,), 1.3, jnp.float32)
    bn_beta = jnp.full((1,), 0.1, jnp.float32)
    bn_mean = jnp.full((1,), -0.05, jnp.float32)
    bn_var = jnp.full((1,), 0.9, jnp.float32)

    out = spatial_gate(x, conv_w, bn_gamma, bn_beta, bn_mean, bn_var)
    out = jax.block_until_ready(out)

    ref = spatial_gate_reference(x, conv_w, bn_gamma, bn_beta, bn_mean, bn_var)
    assert out.shape == (N, C, H, W)
    assert jnp.allclose(out, ref, atol=2e-5, rtol=2e-5), (
        float(jnp.max(jnp.abs(out - ref))))

    print("KERNEL_OK")
</pallas_src>

<mosaic_0001>
module attributes {stable_mosaic.version = 11 : i64} {
  func.func @_spatial_gate_kernel(%arg0: i32, %arg1: memref<1x4x256xf32, #tpu.memory_space<vmem>>, %arg2: memref<14x256xf32, #tpu.memory_space<vmem>>, %arg3: memref<98xf32, #tpu.memory_space<smem>>, %arg4: memref<2xf32, #tpu.memory_space<smem>>, %arg5: memref<1x4x256xf32, #tpu.memory_space<vmem>>) attributes {dimension_semantics = [#tpu.dimension_semantics<parallel>], iteration_bounds = array<i64: 2>, scalar_prefetch = 0 : i64, scratch_operands = 0 : i64, tpu.core_type = #tpu.core_type<tc>, window_params = [{transform_indices = @transform_0, window_bounds = array<i64: 1, 4, 256>}, {pipeline_mode = #tpu.pipeline_mode<synchronous>, transform_indices = @transform_1, window_bounds = array<i64: 14, 256>}, {transform_indices = @transform_2, window_bounds = array<i64: 98>}, {transform_indices = @transform_3, window_bounds = array<i64: 2>}, {transform_indices = @transform_4, window_bounds = array<i64: 1, 4, 256>}]} {
    %c0 = arith.constant 0 : index
    %0 = memref.load %arg4[%c0] : memref<2xf32, #tpu.memory_space<smem>>
    %c1 = arith.constant 1 : index
    %1 = memref.load %arg4[%c1] : memref<2xf32, #tpu.memory_space<smem>>
    %c0_i32 = arith.constant 0 : i32
    %c1_i32 = arith.constant 1 : i32
    %2 = arith.muli %c0_i32, %c1_i32 : i32
    %3 = arith.index_cast %2 : i32 to index
    %c0_0 = arith.constant 0 : index
    %c0_1 = arith.constant 0 : index
    %4 = vector.load %arg1[%3, %c0_0, %c0_1] : memref<1x4x256xf32, #tpu.memory_space<vmem>>, vector<1x1x256xf32>
    %5 = vector.shape_cast %4 : vector<1x1x256xf32> to vector<1x256xf32>
    %6 = arith.index_cast %2 : i32 to index
    %c1_2 = arith.constant 1 : index
    %c0_3 = arith.constant 0 : index
    %7 = vector.load %arg1[%6, %c1_2, %c0_3] : memref<1x4x256xf32, #tpu.memory_space<vmem>>, vector<1x1x256xf32>
    %8 = vector.shape_cast %7 : vector<1x1x256xf32> to vector<1x256xf32>
    %9 = arith.maximumf %5, %8 : vector<1x256xf32>
    %10 = arith.addf %5, %8 : vector<1x256xf32>
    %11 = arith.index_cast %2 : i32 to index
    %c2 = arith.constant 2 : index
    %c0_4 = arith.constant 0 : index
    %12 = vector.load %arg1[%11, %c2, %c0_4] : memref<1x4x256xf32, #tpu.memory_space<vmem>>, vector<1x1x256xf32>
    %13 = vector.shape_cast %12 : vector<1x1x256xf32> to vector<1x256xf32>
    %14 = arith.maximumf %9, %13 : vector<1x256xf32>
    %15 = arith.addf %10, %13 : vector<1x256xf32>
    %16 = arith.index_cast %2 : i32 to index
    %c3 = arith.constant 3 : index
    %c0_5 = arith.constant 0 : index
    %17 = vector.load %arg1[%16, %c3, %c0_5] : memref<1x4x256xf32, #tpu.memory_space<vmem>>, vector<1x1x256xf32>
    %18 = vector.shape_cast %17 : vector<1x1x256xf32> to vector<1x256xf32>
    %19 = arith.maximumf %14, %18 : vector<1x256xf32>
    %20 = arith.addf %15, %18 : vector<1x256xf32>
    %cst = arith.constant 0.000000e+00 : f32
    %21 = vector.broadcast %cst : f32 to vector<1x256xf32>
    %c3_i32 = arith.constant 3 : i32
    %22 = tpu.dynamic_rotate %19 by %c3_i32 dim 1 : vector<1x256xf32>, i32 -> vector<1x256xf32>
    %c0_6 = arith.constant 0 : index
    %c0_7 = arith.constant 0 : index
    %23 = vector.load %arg2[%c0_6, %c0_7] : memref<14x256xf32, #tpu.memory_space<vmem>>, vector<1x256xf32>
    %24 = arith.mulf %22, %23 : vector<1x256xf32>
    %c2_i32 = arith.constant 2 : i32
    %25 = tpu.dynamic_rotate %19 by %c2_i32 dim 1 : vector<1x256xf32>, i32 -> vector<1x256xf32>
    %c1_8 = arith.constant 1 : index
    %c0_9 = arith.constant 0 : index
    %26 = vector.load %arg2[%c1_8, %c0_9] : memref<14x256xf32, #tpu.memory_space<vmem>>, vector<1x256xf32>
    %27 = arith.mulf %25, %26 : vector<1x256xf32>
    %c1_i32_10 = arith.constant 1 : i32
    %28 = tpu.dynamic_rotate %19 by %c1_i32_10 dim 1 : vector<1x256xf32>, i32 -> vector<1x256xf32>
    %c2_11 = arith.constant 2 : index
    %c0_12 = arith.constant 0 : index
    %29 = vector.load %arg2[%c2_11, %c0_12] : memref<14x256xf32, #tpu.memory_space<vmem>>, vector<1x256xf32>
    %30 = arith.mulf %28, %29 : vector<1x256xf32>
    %c255_i32 = arith.constant 255 : i32
    %31 = tpu.dynamic_rotate %19 by %c255_i32 dim 1 : vector<1x256xf32>, i32 -> vector<1x256xf32>
    %c4 = arith.constant 4 : index
    %c0_13 = arith.constant 0 : index
    %32 = vector.load %arg2[%c4, %c0_13] : memref<14x256xf32, #tpu.memory_space<vmem>>, vector<1x256xf32>
    %33 = arith.mulf %31, %32 : vector<1x256xf32>
    %c254_i32 = arith.constant 254 : i32
    %34 = tpu.dynamic_rotate %19 by %c254_i32 dim 1 : vector<1x256xf32>, i32 -> vector<1x256xf32>
    %c5 = arith.constant 5 : index
    %c0_14 = arith.constant 0 : index
    %35 = vector.load %arg2[%c5, %c0_14] : memref<14x256xf32, #tpu.memory_space<vmem>>, vector<1x256xf32>
    %36 = arith.mulf %34, %35 : vector<1x256xf32>
    %c253_i32 = arith.constant 253 : i32
    %37 = tpu.dynamic_rotate %19 by %c253_i32 dim 1 : vector<1x256xf32>, i32 -> vector<1x256xf32>
    %c6 = arith.constant 6 : index
    %c0_15 = arith.constant 0 : index
    %38 = vector.load %arg2[%c6, %c0_15] : memref<14x256xf32, #tpu.memory_space<vmem>>, vector<1x256xf32>
    %39 = arith.mulf %37, %38 : vector<1x256xf32>
    %c0_16 = arith.constant 0 : index
    %40 = memref.load %arg3[%c0_16] : memref<98xf32, #tpu.memory_space<smem>>
    %41 = vector.broadcast %40 : f32 to vector<1x256xf32>
    %42 = arith.mulf %24, %41 : vector<1x256xf32>
    %c1_17 = arith.constant 1 : index
    %43 = memref.load %arg3[%c1_17] : memref<98xf32, #tpu.memory_space<smem>>
    %44 = vector.broadcast %43 : f32 to vector<1x256xf32>
    %45 = arith.mulf %27, %44 : vector<1x256xf32>
    %46 = arith.addf %42, %45 : vector<1x256xf32>
    %c2_18 = arith.constant 2 : index
    %47 = memref.load %arg3[%c2_18] : memref<98xf32, #tpu.memory_space<smem>>
    %48 = vector.broadcast %47 : f32 to vector<1x256xf32>
    %49 = arith.mulf %30, %48 : vector<1x256xf32>
    %50 = arith.addf %46, %49 : vector<1x256xf32>
    %c3_19 = arith.constant 3 : index
    %51 = memref.load %arg3[%c3_19] : memref<98xf32, #tpu.memory_space<smem>>
    %52 = vector.broadcast %51 : f32 to vector<1x256xf32>
    %53 = arith.mulf %19, %52 : vector<1x256xf32>
    %54 = arith.addf %50, %53 : vector<1x256xf32>
    %c4_20 = arith.constant 4 : index
    %55 = memref.load %arg3[%c4_20] : memref<98xf32, #tpu.memory_space<smem>>
    %56 = vector.broadcast %55 : f32 to vector<1x256xf32>
    %57 = arith.mulf %33, %56 : vector<1x256xf32>
    %58 = arith.addf %54, %57 : vector<1x256xf32>
    %c5_21 = arith.constant 5 : index
    %59 = memref.load %arg3[%c5_21] : memref<98xf32, #tpu.memory_space<smem>>
    %60 = vector.broadcast %59 : f32 to vector<1x256xf32>
    %61 = arith.mulf %36, %60 : vector<1x256xf32>
    %62 = arith.addf %58, %61 : vector<1x256xf32>
    %c6_22 = arith.constant 6 : index
    %63 = memref.load %arg3[%c6_22] : memref<98xf32, #tpu.memory_space<smem>>
    %64 = vector.broadcast %63 : f32 to vector<1x256xf32>
    %65 = arith.mulf %39, %64 : vector<1x256xf32>
    %66 = arith.addf %62, %65 : vector<1x256xf32>
    %c48_i32 = arith.constant 48 : i32
    %67 = tpu.dynamic_rotate %66 by %c48_i32 dim 1 : vector<1x256xf32>, i32 -> vector<1x256xf32>
    %c7 = arith.constant 7 : index
    %c0_23 = arith.constant 0 : index
    %68 = vector.load %arg2[%c7, %c0_23] : memref<14x256xf32, #tpu.memory_space<vmem>>, vector<1x256xf32>
    %69 = arith.mulf %67, %68 : vector<1x256xf32>
    %70 = arith.addf %21, %69 : vector<1x256xf32>
    %c7_24 = arith.constant 7 : index
    %71 = memref.load %arg3[%c7_24] : memref<98xf32, #tpu.memory_space<smem>>
    %72 = vector.broadcast %71 : f32 to vector<1x256xf32>
    %73 = arith.mulf %24, %72 : vector<1x256xf32>
    %c8 = arith.constant 8 : index
    %74 = memref.load %arg3[%c8] : memref<98xf32, #tpu.memory_space<smem>>
    %75 = vector.broadcast %74 : f32 to vector<1x256xf32>
    %76 = arith.mulf %27, %75 : vector<1x256xf32>
    %77 = arith.addf %73, %76 : vector<1x256xf32>
    %c9 = arith.constant 9 : index
    %78 = memref.load %arg3[%c9] : memref<98xf32, #tpu.memory_space<smem>>
    %79 = vector.broadcast %78 : f32 to vector<1x256xf32>
    %80 = arith.mulf %30, %79 : vector<1x256xf32>
    %81 = arith.addf %77, %80 : vector<1x256xf32>
    %c10 = arith.constant 10 : index
    %82 = memref.load %arg3[%c10] : memref<98xf32, #tpu.memory_space<smem>>
    %83 = vector.broadcast %82 : f32 to vector<1x256xf32>
    %84 = arith.mulf %19, %83 : vector<1x256xf32>
    %85 = arith.addf %81, %84 : vector<1x256xf32>
    %c11 = arith.constant 11 : index
    %86 = memref.load %arg3[%c11] : memref<98xf32, #tpu.memory_space<smem>>
    %87 = vector.broadcast %86 : f32 to vector<1x256xf32>
    %88 = arith.mulf %33, %87 : vector<1x256xf32>
    %89 = arith.addf %85, %88 : vector<1x256xf32>
    %c12 = arith.constant 12 : index
    %90 = memref.load %arg3[%c12] : memref<98xf32, #tpu.memory_space<smem>>
    %91 = vector.broadcast %90 : f32 to vector<1x256xf32>
    %92 = arith.mulf %36, %91 : vector<1x256xf32>
    %93 = arith.addf %89, %92 : vector<1x256xf32>
    %c13 = arith.constant 13 : index
    %94 = memref.load %arg3[%c13] : memref<98xf32, #tpu.memory_space<smem>>
    %95 = vector.broadcast %94 : f32 to vector<1x256xf32>
    %96 = arith.mulf %39, %95 : vector<1x256xf32>
    %97 = arith.addf %93, %96 : vector<1x256xf32>
    %c32_i32 = arith.constant 32 : i32
    %98 = tpu.dynamic_rotate %97 by %c32_i32 dim 1 : vector<1x256xf32>, i32 -> vector<1x256xf32>
    %c8_25 = arith.constant 8 : index
    %c0_26 = arith.constant 0 : index
    %99 = vector.load %arg2[%c8_25, %c0_26] : memref<14x256xf32, #tpu.memory_space<vmem>>, vector<1x256xf32>
    %100 = arith.mulf %98, %99 : vector<1x256xf32>
    %101 = arith.addf %70, %100 : vector<1x256xf32>
    %c14 = arith.constant 14 : index
    %102 = memref.load %arg3[%c14] : memref<98xf32, #tpu.memory_space<smem>>
    %103 = vector.broadcast %102 : f32 to vector<1x256xf32>
    %104 = arith.mulf %24, %103 : vector<1x256xf32>
    %c15 = arith.constant 15 : index
    %105 = memref.load %arg3[%c15] : memref<98xf32, #tpu.memory_space<smem>>
    %106 = vector.broadcast %105 : f32 to vector<1x256xf32>
    %107 = arith.mulf %27, %106 : vector<1x256xf32>
    %108 = arith.addf %104, %107 : vector<1x256xf32>
    %c16 = arith.constant 16 : index
    %109 = memref.load %arg3[%c16] : memref<98xf32, #tpu.memory_space<smem>>
    %110 = vector.broadcast %109 : f32 to vector<1x256xf32>
    %111 = arith.mulf %30, %110 : vector<1x256xf32>
    %112 = arith.addf %108, %111 : vector<1x256xf32>
    %c17 = arith.constant 17 : index
    %113 = memref.load %arg3[%c17] : memref<98xf32, #tpu.memory_space<smem>>
    %114 = vector.broadcast %113 : f32 to vector<1x256xf32>
    %115 = arith.mulf %19, %114 : vector<1x256xf32>
    %116 = arith.addf %112, %115 : vector<1x256xf32>
    %c18 = arith.constant 18 : index
    %117 = memref.load %arg3[%c18] : memref<98xf32, #tpu.memory_space<smem>>
    %118 = vector.broadcast %117 : f32 to vector<1x256xf32>
    %119 = arith.mulf %33, %118 : vector<1x256xf32>
    %120 = arith.addf %116, %119 : vector<1x256xf32>
    %c19 = arith.constant 19 : index
    %121 = memref.load %arg3[%c19] : memref<98xf32, #tpu.memory_space<smem>>
    %122 = vector.broadcast %121 : f32 to vector<1x256xf32>
    %123 = arith.mulf %36, %122 : vector<1x256xf32>
    %124 = arith.addf %120, %123 : vector<1x256xf32>
    %c20 = arith.constant 20 : index
    %125 = memref.load %arg3[%c20] : memref<98xf32, #tpu.memory_space<smem>>
    %126 = vector.broadcast %125 : f32 to vector<1x256xf32>
    %127 = arith.mulf %39, %126 : vector<1x256xf32>
    %128 = arith.addf %124, %127 : vector<1x256xf32>
    %c16_i32 = arith.constant 16 : i32
    %129 = tpu.dynamic_rotate %128 by %c16_i32 dim 1 : vector<1x256xf32>, i32 -> vector<1x256xf32>
    %c9_27 = arith.constant 9 : index
    %c0_28 = arith.constant 0 : index
    %130 = vector.load %arg2[%c9_27, %c0_28] : memref<14x256xf32, #tpu.memory_space<vmem>>, vector<1x256xf32>
    %131 = arith.mulf %129, %130 : vector<1x256xf32>
    %132 = arith.addf %101, %131 : vector<1x256xf32>
    %c21 = arith.constant 21 : index
    %133 = memref.load %arg3[%c21] : memref<98xf32, #tpu.memory_space<smem>>
    %134 = vector.broadcast %133 : f32 to vector<1x256xf32>
    %135 = arith.mulf %24, %134 : vector<1x256xf32>
    %c22 = arith.constant 22 : index
    %136 = memref.load %arg3[%c22] : memref<98xf32, #tpu.memory_space<smem>>
    %137 = vector.broadcast %136 : f32 to vector<1x256xf32>
    %138 = arith.mulf %27, %137 : vector<1x256xf32>
    %139 = arith.addf %135, %138 : vector<1x256xf32>
    %c23 = arith.constant 23 : index
    %140 = memref.load %arg3[%c23] : memref<98xf32, #tpu.memory_space<smem>>
    %141 = vector.broadcast %140 : f32 to vector<1x256xf32>
    %142 = arith.mulf %30, %141 : vector<1x256xf32>
    %143 = arith.addf %139, %142 : vector<1x256xf32>
    %c24 = arith.constant 24 : index
    %144 = memref.load %arg3[%c24] : memref<98xf32, #tpu.memory_space<smem>>
    %145 = vector.broadcast %144 : f32 to vector<1x256xf32>
    %146 = arith.mulf %19, %145 : vector<1x256xf32>
    %147 = arith.addf %143, %146 : vector<1x256xf32>
    %c25 = arith.constant 25 : index
    %148 = memref.load %arg3[%c25] : memref<98xf32, #tpu.memory_space<smem>>
    %149 = vector.broadcast %148 : f32 to vector<1x256xf32>
    %150 = arith.mulf %33, %149 : vector<1x256xf32>
    %151 = arith.addf %147, %150 : vector<1x256xf32>
    %c26 = arith.constant 26 : index
    %152 = memref.load %arg3[%c26] : memref<98xf32, #tpu.memory_space<smem>>
    %153 = vector.broadcast %152 : f32 to vector<1x256xf32>
    %154 = arith.mulf %36, %153 : vector<1x256xf32>
    %155 = arith.addf %151, %154 : vector<1x256xf32>
    %c27 = arith.constant 27 : index
    %156 = memref.load %arg3[%c27] : memref<98xf32, #tpu.memory_space<smem>>
    %157 = vector.broadcast %156 : f32 to vector<1x256xf32>
    %158 = arith.mulf %39, %157 : vector<1x256xf32>
    %159 = arith.addf %155, %158 : vector<1x256xf32>
    %160 = arith.addf %132, %159 : vector<1x256xf32>
    %c28 = arith.constant 28 : index
    %161 = memref.load %arg3[%c28] : memref<98xf32, #tpu.memory_space<smem>>
    %162 = vector.broadcast %161 : f32 to vector<1x256xf32>
    %163 = arith.mulf %24, %162 : vector<1x256xf32>
    %c29 = arith.constant 29 : index
    %164 = memref.load %arg3[%c29] : memref<98xf32, #tpu.memory_space<smem>>
    %165 = vector.broadcast %164 : f32 to vector<1x256xf32>
    %166 = arith.mulf %27, %165 : vector<1x256xf32>
    %167 = arith.addf %163, %166 : vector<1x256xf32>
    %c30 = arith.constant 30 : index
    %168 = memref.load %arg3[%c30] : memref<98xf32, #tpu.memory_space<smem>>
    %169 = vector.broadcast %168 : f32 to vector<1x256xf32>
    %170 = arith.mulf %30, %169 : vector<1x256xf32>
    %171 = arith.addf %167, %170 : vector<1x256xf32>
    %c31 = arith.constant 31 : index
    %172 = memref.load %arg3[%c31] : memref<98xf32, #tpu.memory_space<smem>>
    %173 = vector.broadcast %172 : f32 to vector<1x256xf32>
    %174 = arith.mulf %19, %173 : vector<1x256xf32>
    %175 = arith.addf %171, %174 : vector<1x256xf32>
    %c32 = arith.constant 32 : index
    %176 = memref.load %arg3[%c32] : memref<98xf32, #tpu.memory_space<smem>>
    %177 = vector.broadcast %176 : f32 to vector<1x256xf32>
    %178 = arith.mulf %33, %177 : vector<1x256xf32>
    %179 = arith.addf %175, %178 : vector<1x256xf32>
    %c33 = arith.constant 33 : index
    %180 = memref.load %arg3[%c33] : memref<98xf32, #tpu.memory_space<smem>>
    %181 = vector.broadcast %180 : f32 to vector<1x256xf32>
    %182 = arith.mulf %36, %181 : vector<1x256xf32>
    %183 = arith.addf %179, %182 : vector<1x256xf32>
    %c34 = arith.constant 34 : index
    %184 = memref.load %arg3[%c34] : memref<98xf32, #tpu.memory_space<smem>>
    %185 = vector.broadcast %184 : f32 to vector<1x256xf32>
    %186 = arith.mulf %39, %185 : vector<1x256xf32>
    %187 = arith.addf %183, %186 : vector<1x256xf32>
    %c240_i32 = arith.constant 240 : i32
    %188 = tpu.dynamic_rotate %187 by %c240_i32 dim 1 : vector<1x256xf32>, i32 -> vector<1x256xf32>
    %c11_29 = arith.constant 11 : index
    %c0_30 = arith.constant 0 : index
    %189 = vector.load %arg2[%c11_29, %c0_30] : memref<14x256xf32, #tpu.memory_space<vmem>>, vector<1x256xf32>
    %190 = arith.mulf %188, %189 : vector<1x256xf32>
    %191 = arith.addf %160, %190 : vector<1x256xf32>
    %c35 = arith.constant 35 : index
    %192 = memref.load %arg3[%c35] : memref<98xf32, #tpu.memory_space<smem>>
    %193 = vector.broadcast %192 : f32 to vector<1x256xf32>
    %194 = arith.mulf %24, %193 : vector<1x256xf32>
    %c36 = arith.constant 36 : index
    %195 = memref.load %arg3[%c36] : memref<98xf32, #tpu.memory_space<smem>>
    %196 = vector.broadcast %195 : f32 to vector<1x256xf32>
    %197 = arith.mulf %27, %196 : vector<1x256xf32>
    %198 = arith.addf %194, %197 : vector<1x256xf32>
    %c37 = arith.constant 37 : index
    %199 = memref.load %arg3[%c37] : memref<98xf32, #tpu.memory_space<smem>>
    %200 = vector.broadcast %199 : f32 to vector<1x256xf32>
    %201 = arith.mulf %30, %200 : vector<1x256xf32>
    %202 = arith.addf %198, %201 : vector<1x256xf32>
    %c38 = arith.constant 38 : index
    %203 = memref.load %arg3[%c38] : memref<98xf32, #tpu.memory_space<smem>>
    %204 = vector.broadcast %203 : f32 to vector<1x256xf32>
    %205 = arith.mulf %19, %204 : vector<1x256xf32>
    %206 = arith.addf %202, %205 : vector<1x256xf32>
    %c39 = arith.constant 39 : index
    %207 = memref.load %arg3[%c39] : memref<98xf32, #tpu.memory_space<smem>>
    %208 = vector.broadcast %207 : f32 to vector<1x256xf32>
    %209 = arith.mulf %33, %208 : vector<1x256xf32>
    %210 = arith.addf %206, %209 : vector<1x256xf32>
    %c40 = arith.constant 40 : index
    %211 = memref.load %arg3[%c40] : memref<98xf32, #tpu.memory_space<smem>>
    %212 = vector.broadcast %211 : f32 to vector<1x256xf32>
    %213 = arith.mulf %36, %212 : vector<1x256xf32>
    %214 = arith.addf %210, %213 : vector<1x256xf32>
    %c41 = arith.constant 41 : index
    %215 = memref.load %arg3[%c41] : memref<98xf32, #tpu.memory_space<smem>>
    %216 = vector.broadcast %215 : f32 to vector<1x256xf32>
    %217 = arith.mulf %39, %216 : vector<1x256xf32>
    %218 = arith.addf %214, %217 : vector<1x256xf32>
    %c224_i32 = arith.constant 224 : i32
    %219 = tpu.dynamic_rotate %218 by %c224_i32 dim 1 : vector<1x256xf32>, i32 -> vector<1x256xf32>
    %c12_31 = arith.constant 12 : index
    %c0_32 = arith.constant 0 : index
    %220 = vector.load %arg2[%c12_31, %c0_32] : memref<14x256xf32, #tpu.memory_space<vmem>>, vector<1x256xf32>
    %221 = arith.mulf %219, %220 : vector<1x256xf32>
    %222 = arith.addf %191, %221 : vector<1x256xf32>
    %c42 = arith.constant 42 : index
    %223 = memref.load %arg3[%c42] : memref<98xf32, #tpu.memory_space<smem>>
    %224 = vector.broadcast %223 : f32 to vector<1x256xf32>
    %225 = arith.mulf %24, %224 : vector<1x256xf32>
    %c43 = arith.constant 43 : index
    %226 = memref.load %arg3[%c43] : memref<98xf32, #tpu.memory_space<smem>>
    %227 = vector.broadcast %226 : f32 to vector<1x256xf32>
    %228 = arith.mulf %27, %227 : vector<1x256xf32>
    %229 = arith.addf %225, %228 : vector<1x256xf32>
    %c44 = arith.constant 44 : index
    %230 = memref.load %arg3[%c44] : memref<98xf32, #tpu.memory_space<smem>>
    %231 = vector.broadcast %230 : f32 to vector<1x256xf32>
    %232 = arith.mulf %30, %231 : vector<1x256xf32>
    %233 = arith.addf %229, %232 : vector<1x256xf32>
    %c45 = arith.constant 45 : index
    %234 = memref.load %arg3[%c45] : memref<98xf32, #tpu.memory_space<smem>>
    %235 = vector.broadcast %234 : f32 to vector<1x256xf32>
    %236 = arith.mulf %19, %235 : vector<1x256xf32>
    %237 = arith.addf %233, %236 : vector<1x256xf32>
    %c46 = arith.constant 46 : index
    %238 = memref.load %arg3[%c46] : memref<98xf32, #tpu.memory_space<smem>>
    %239 = vector.broadcast %238 : f32 to vector<1x256xf32>
    %240 = arith.mulf %33, %239 : vector<1x256xf32>
    %241 = arith.addf %237, %240 : vector<1x256xf32>
    %c47 = arith.constant 47 : index
    %242 = memref.load %arg3[%c47] : memref<98xf32, #tpu.memory_space<smem>>
    %243 = vector.broadcast %242 : f32 to vector<1x256xf32>
    %244 = arith.mulf %36, %243 : vector<1x256xf32>
    %245 = arith.addf %241, %244 : vector<1x256xf32>
    %c48 = arith.constant 48 : index
    %246 = memref.load %arg3[%c48] : memref<98xf32, #tpu.memory_space<smem>>
    %247 = vector.broadcast %246 : f32 to vector<1x256xf32>
    %248 = arith.mulf %39, %247 : vector<1x256xf32>
    %249 = arith.addf %245, %248 : vector<1x256xf32>
    %c208_i32 = arith.constant 208 : i32
    %250 = tpu.dynamic_rotate %249 by %c208_i32 dim 1 : vector<1x256xf32>, i32 -> vector<1x256xf32>
    %c13_33 = arith.constant 13 : index
    %c0_34 = arith.constant 0 : index
    %251 = vector.load %arg2[%c13_33, %c0_34] : memref<14x256xf32, #tpu.memory_space<vmem>>, vector<1x256xf32>
    %252 = arith.mulf %250, %251 : vector<1x256xf32>
    %253 = arith.addf %222, %252 : vector<1x256xf32>
    %c3_i32_35 = arith.constant 3 : i32
    %254 = tpu.dynamic_rotate %20 by %c3_i32_35 dim 1 : vector<1x256xf32>, i32 -> vector<1x256xf32>
    %c0_36 = arith.constant 0 : index
    %c0_37 = arith.constant 0 : index
    %255 = vector.load %arg2[%c0_36, %c0_37] : memref<14x256xf32, #tpu.memory_space<vmem>>, vector<1x256xf32>
    %256 = arith.mulf %254, %255 : vector<1x256xf32>
    %c2_i32_38 = arith.constant 2 : i32
    %257 = tpu.dynamic_rotate %20 by %c2_i32_38 dim 1 : vector<1x256xf32>, i32 -> vector<1x256xf32>
    %c1_39 = arith.constant 1 : index
    %c0_40 = arith.constant 0 : index
    %258 = vector.load %arg2[%c1_39, %c0_40] : memref<14x256xf32, #tpu.memory_space<vmem>>, vector<1x256xf32>
    %259 = arith.mulf %257, %258 : vector<1x256xf32>
    %c1_i32_41 = arith.constant 1 : i32
    %260 = tpu.dynamic_rotate %20 by %c1_i32_41 dim 1 : vector<1x256xf32>, i32 -> vector<1x256xf32>
    %c2_42 = arith.constant 2 : index
    %c0_43 = arith.constant 0 : index
    %261 = vector.load %arg2[%c2_42, %c0_43] : memref<14x256xf32, #tpu.memory_space<vmem>>, vector<1x256xf32>
    %262 = arith.mulf %260, %261 : vector<1x256xf32>
    %c255_i32_44 = arith.constant 255 : i32
    %263 = tpu.dynamic_rotate %20 by %c255_i32_44 dim 1 : vector<1x256xf32>, i32 -> vector<1x256xf32>
    %c4_45 = arith.constant 4 : index
    %c0_46 = arith.constant 0 : index
    %264 = vector.load %arg2[%c4_45, %c0_46] : memref<14x256xf32, #tpu.memory_space<vmem>>, vector<1x256xf32>
    %265 = arith.mulf %263, %264 : vector<1x256xf32>
    %c254_i32_47 = arith.constant 254 : i32
    %266 = tpu.dynamic_rotate %20 by %c254_i32_47 dim 1 : vector<1x256xf32>, i32 -> vector<1x256xf32>
    %c5_48 = arith.constant 5 : index
    %c0_49 = arith.constant 0 : index
    %267 = vector.load %arg2[%c5_48, %c0_49] : memref<14x256xf32, #tpu.memory_space<vmem>>, vector<1x256xf32>
    %268 = arith.mulf %266, %267 : vector<1x256xf32>
    %c253_i32_50 = arith.constant 253 : i32
    %269 = tpu.dynamic_rotate %20 by %c253_i32_50 dim 1 : vector<1x256xf32>, i32 -> vector<1x256xf32>
    %c6_51 = arith.constant 6 : index
    %c0_52 = arith.constant 0 : index
    %270 = vector.load %arg2[%c6_51, %c0_52] : memref<14x256xf32, #tpu.memory_space<vmem>>, vector<1x256xf32>
    %271 = arith.mulf %269, %270 : vector<1x256xf32>
    %c49 = arith.constant 49 : index
    %272 = memref.load %arg3[%c49] : memref<98xf32, #tpu.memory_space<smem>>
    %273 = vector.broadcast %272 : f32 to vector<1x256xf32>
    %274 = arith.mulf %256, %273 : vector<1x256xf32>
    %c50 = arith.constant 50 : index
    %275 = memref.load %arg3[%c50] : memref<98xf32, #tpu.memory_space<smem>>
    %276 = vector.broadcast %275 : f32 to vector<1x256xf32>
    %277 = arith.mulf %259, %276 : vector<1x256xf32>
    %278 = arith.addf %274, %277 : vector<1x256xf32>
    %c51 = arith.constant 51 : index
    %279 = memref.load %arg3[%c51] : memref<98xf32, #tpu.memory_space<smem>>
    %280 = vector.broadcast %279 : f32 to vector<1x256xf32>
    %281 = arith.mulf %262, %280 : vector<1x256xf32>
    %282 = arith.addf %278, %281 : vector<1x256xf32>
    %c52 = arith.constant 52 : index
    %283 = memref.load %arg3[%c52] : memref<98xf32, #tpu.memory_space<smem>>
    %284 = vector.broadcast %283 : f32 to vector<1x256xf32>
    %285 = arith.mulf %20, %284 : vector<1x256xf32>
    %286 = arith.addf %282, %285 : vector<1x256xf32>
    %c53 = arith.constant 53 : index
    %287 = memref.load %arg3[%c53] : memref<98xf32, #tpu.memory_space<smem>>
    %288 = vector.broadcast %287 : f32 to vector<1x256xf32>
    %289 = arith.mulf %265, %288 : vector<1x256xf32>
    %290 = arith.addf %286, %289 : vector<1x256xf32>
    %c54 = arith.constant 54 : index
    %291 = memref.load %arg3[%c54] : memref<98xf32, #tpu.memory_space<smem>>
    %292 = vector.broadcast %291 : f32 to vector<1x256xf32>
    %293 = arith.mulf %268, %292 : vector<1x256xf32>
    %294 = arith.addf %290, %293 : vector<1x256xf32>
    %c55 = arith.constant 55 : index
    %295 = memref.load %arg3[%c55] : memref<98xf32, #tpu.memory_space<smem>>
    %296 = vector.broadcast %295 : f32 to vector<1x256xf32>
    %297 = arith.mulf %271, %296 : vector<1x256xf32>
    %298 = arith.addf %294, %297 : vector<1x256xf32>
    %c48_i32_53 = arith.constant 48 : i32
    %299 = tpu.dynamic_rotate %298 by %c48_i32_53 dim 1 : vector<1x256xf32>, i32 -> vector<1x256xf32>
    %c7_54 = arith.constant 7 : index
    %c0_55 = arith.constant 0 : index
    %300 = vector.load %arg2[%c7_54, %c0_55] : memref<14x256xf32, #tpu.memory_space<vmem>>, vector<1x256xf32>
    %301 = arith.mulf %299, %300 : vector<1x256xf32>
    %302 = arith.addf %253, %301 : vector<1x256xf32>
    %c56 = arith.constant 56 : index
    %303 = memref.load %arg3[%c56] : memref<98xf32, #tpu.memory_space<smem>>
    %304 = vector.broadcast %303 : f32 to vector<1x256xf32>
    %305 = arith.mulf %256, %304 : vector<1x256xf32>
    %c57 = arith.constant 57 : index
    %306 = memref.load %arg3[%c57] : memref<98xf32, #tpu.memory_space<smem>>
    %307 = vector.broadcast %306 : f32 to vector<1x256xf32>
    %308 = arith.mulf %259, %307 : vector<1x256xf32>
    %309 = arith.addf %305, %308 : vector<1x256xf32>
    %c58 = arith.constant 58 : index
    %310 = memref.load %arg3[%c58] : memref<98xf32, #tpu.memory_space<smem>>
    %311 = vector.broadcast %310 : f32 to vector<1x256xf32>
    %312 = arith.mulf %262, %311 : vector<1x256xf32>
    %313 = arith.addf %309, %312 : vector<1x256xf32>
    %c59 = arith.constant 59 : index
    %314 = memref.load %arg3[%c59] : memref<98xf32, #tpu.memory_space<smem>>
    %315 = vector.broadcast %314 : f32 to vector<1x256xf32>
    %316 = arith.mulf %20, %315 : vector<1x256xf32>
    %317 = arith.addf %313, %316 : vector<1x256xf32>
    %c60 = arith.constant 60 : index
    %318 = memref.load %arg3[%c60] : memref<98xf32, #tpu.memory_space<smem>>
    %319 = vector.broadcast %318 : f32 to vector<1x256xf32>
    %320 = arith.mulf %265, %319 : vector<1x256xf32>
    %321 = arith.addf %317, %320 : vector<1x256xf32>
    %c61 = arith.constant 61 : index
    %322 = memref.load %arg3[%c61] : memref<98xf32, #tpu.memory_space<smem>>
    %323 = vector.broadcast %322 : f32 to vector<1x256xf32>
    %324 = arith.mulf %268, %323 : vector<1x256xf32>
    %325 = arith.addf %321, %324 : vector<1x256xf32>
    %c62 = arith.constant 62 : index
    %326 = memref.load %arg3[%c62] : memref<98xf32, #tpu.memory_space<smem>>
    %327 = vector.broadcast %326 : f32 to vector<1x256xf32>
    %328 = arith.mulf %271, %327 : vector<1x256xf32>
    %329 = arith.addf %325, %328 : vector<1x256xf32>
    %c32_i32_56 = arith.constant 32 : i32
    %330 = tpu.dynamic_rotate %329 by %c32_i32_56 dim 1 : vector<1x256xf32>, i32 -> vector<1x256xf32>
    %c8_57 = arith.constant 8 : index
    %c0_58 = arith.constant 0 : index
    %331 = vector.load %arg2[%c8_57, %c0_58] : memref<14x256xf32, #tpu.memory_space<vmem>>, vector<1x256xf32>
    %332 = arith.mulf %330, %331 : vector<1x256xf32>
    %333 = arith.addf %302, %332 : vector<1x256xf32>
    %c63 = arith.constant 63 : index
    %334 = memref.load %arg3[%c63] : memref<98xf32, #tpu.memory_space<smem>>
    %335 = vector.broadcast %334 : f32 to vector<1x256xf32>
    %336 = arith.mulf %256, %335 : vector<1x256xf32>
    %c64 = arith.constant 64 : index
    %337 = memref.load %arg3[%c64] : memref<98xf32, #tpu.memory_space<smem>>
    %338 = vector.broadcast %337 : f32 to vector<1x256xf32>
    %339 = arith.mulf %259, %338 : vector<1x256xf32>
    %340 = arith.addf %336, %339 : vector<1x256xf32>
    %c65 = arith.constant 65 : index
    %341 = memref.load %arg3[%c65] : memref<98xf32, #tpu.memory_space<smem>>
    %342 = vector.broadcast %341 : f32 to vector<1x256xf32>
    %343 = arith.mulf %262, %342 : vector<1x256xf32>
    %344 = arith.addf %340, %343 : vector<1x256xf32>
    %c66 = arith.constant 66 : index
    %345 = memref.load %arg3[%c66] : memref<98xf32, #tpu.memory_space<smem>>
    %346 = vector.broadcast %345 : f32 to vector<1x256xf32>
    %347 = arith.mulf %20, %346 : vector<1x256xf32>
    %348 = arith.addf %344, %347 : vector<1x256xf32>
    %c67 = arith.constant 67 : index
    %349 = memref.load %arg3[%c67] : memref<98xf32, #tpu.memory_space<smem>>
    %350 = vector.broadcast %349 : f32 to vector<1x256xf32>
    %351 = arith.mulf %265, %350 : vector<1x256xf32>
    %352 = arith.addf %348, %351 : vector<1x256xf32>
    %c68 = arith.constant 68 : index
    %353 = memref.load %arg3[%c68] : memref<98xf32, #tpu.memory_space<smem>>
    %354 = vector.broadcast %353 : f32 to vector<1x256xf32>
    %355 = arith.mulf %268, %354 : vector<1x256xf32>
    %356 = arith.addf %352, %355 : vector<1x256xf32>
    %c69 = arith.constant 69 : index
    %357 = memref.load %arg3[%c69] : memref<98xf32, #tpu.memory_space<smem>>
    %358 = vector.broadcast %357 : f32 to vector<1x256xf32>
    %359 = arith.mulf %271, %358 : vector<1x256xf32>
    %360 = arith.addf %356, %359 : vector<1x256xf32>
    %c16_i32_59 = arith.constant 16 : i32
    %361 = tpu.dynamic_rotate %360 by %c16_i32_59 dim 1 : vector<1x256xf32>, i32 -> vector<1x256xf32>
    %c9_60 = arith.constant 9 : index
    %c0_61 = arith.constant 0 : index
    %362 = vector.load %arg2[%c9_60, %c0_61] : memref<14x256xf32, #tpu.memory_space<vmem>>, vector<1x256xf32>
    %363 = arith.mulf %361, %362 : vector<1x256xf32>
    %364 = arith.addf %333, %363 : vector<1x256xf32>
    %c70 = arith.constant 70 : index
    %365 = memref.load %arg3[%c70] : memref<98xf32, #tpu.memory_space<smem>>
    %366 = vector.broadcast %365 : f32 to vector<1x256xf32>
    %367 = arith.mulf %256, %366 : vector<1x256xf32>
    %c71 = arith.constant 71 : index
    %368 = memref.load %arg3[%c71] : memref<98xf32, #tpu.memory_space<smem>>
    %369 = vector.broadcast %368 : f32 to vector<1x256xf32>
    %370 = arith.mulf %259, %369 : vector<1x256xf32>
    %371 = arith.addf %367, %370 : vector<1x256xf32>
    %c72 = arith.constant 72 : index
    %372 = memref.load %arg3[%c72] : memref<98xf32, #tpu.memory_space<smem>>
    %373 = vector.broadcast %372 : f32 to vector<1x256xf32>
    %374 = arith.mulf %262, %373 : vector<1x256xf32>
    %375 = arith.addf %371, %374 : vector<1x256xf32>
    %c73 = arith.constant 73 : index
    %376 = memref.load %arg3[%c73] : memref<98xf32, #tpu.memory_space<smem>>
    %377 = vector.broadcast %376 : f32 to vector<1x256xf32>
    %378 = arith.mulf %20, %377 : vector<1x256xf32>
    %379 = arith.addf %375, %378 : vector<1x256xf32>
    %c74 = arith.constant 74 : index
    %380 = memref.load %arg3[%c74] : memref<98xf32, #tpu.memory_space<smem>>
    %381 = vector.broadcast %380 : f32 to vector<1x256xf32>
    %382 = arith.mulf %265, %381 : vector<1x256xf32>
    %383 = arith.addf %379, %382 : vector<1x256xf32>
    %c75 = arith.constant 75 : index
    %384 = memref.load %arg3[%c75] : memref<98xf32, #tpu.memory_space<smem>>
    %385 = vector.broadcast %384 : f32 to vector<1x256xf32>
    %386 = arith.mulf %268, %385 : vector<1x256xf32>
    %387 = arith.addf %383, %386 : vector<1x256xf32>
    %c76 = arith.constant 76 : index
    %388 = memref.load %arg3[%c76] : memref<98xf32, #tpu.memory_space<smem>>
    %389 = vector.broadcast %388 : f32 to vector<1x256xf32>
    %390 = arith.mulf %271, %389 : vector<1x256xf32>
    %391 = arith.addf %387, %390 : vector<1x256xf32>
    %392 = arith.addf %364, %391 : vector<1x256xf32>
    %c77 = arith.constant 77 : index
    %393 = memref.load %arg3[%c77] : memref<98xf32, #tpu.memory_space<smem>>
    %394 = vector.broadcast %393 : f32 to vector<1x256xf32>
    %395 = arith.mulf %256, %394 : vector<1x256xf32>
    %c78 = arith.constant 78 : index
    %396 = memref.load %arg3[%c78] : memref<98xf32, #tpu.memory_space<smem>>
    %397 = vector.broadcast %396 : f32 to vector<1x256xf32>
    %398 = arith.mulf %259, %397 : vector<1x256xf32>
    %399 = arith.addf %395, %398 : vector<1x256xf32>
    %c79 = arith.constant 79 : index
    %400 = memref.load %arg3[%c79] : memref<98xf32, #tpu.memory_space<smem>>
    %401 = vector.broadcast %400 : f32 to vector<1x256xf32>
    %402 = arith.mulf %262, %401 : vector<1x256xf32>
    %403 = arith.addf %399, %402 : vector<1x256xf32>
    %c80 = arith.constant 80 : index
    %404 = memref.load %arg3[%c80] : memref<98xf32, #tpu.memory_space<smem>>
    %405 = vector.broadcast %404 : f32 to vector<1x256xf32>
    %406 = arith.mulf %20, %405 : vector<1x256xf32>
    %407 = arith.addf %403, %406 : vector<1x256xf32>
    %c81 = arith.constant 81 : index
    %408 = memref.load %arg3[%c81] : memref<98xf32, #tpu.memory_space<smem>>
    %409 = vector.broadcast %408 : f32 to vector<1x256xf32>
    %410 = arith.mulf %265, %409 : vector<1x256xf32>
    %411 = arith.addf %407, %410 : vector<1x256xf32>
    %c82 = arith.constant 82 : index
    %412 = memref.load %arg3[%c82] : memref<98xf32, #tpu.memory_space<smem>>
    %413 = vector.broadcast %412 : f32 to vector<1x256xf32>
    %414 = arith.mulf %268, %413 : vector<1x256xf32>
    %415 = arith.addf %411, %414 : vector<1x256xf32>
    %c83 = arith.constant 83 : index
    %416 = memref.load %arg3[%c83] : memref<98xf32, #tpu.memory_space<smem>>
    %417 = vector.broadcast %416 : f32 to vector<1x256xf32>
    %418 = arith.mulf %271, %417 : vector<1x256xf32>
    %419 = arith.addf %415, %418 : vector<1x256xf32>
    %c240_i32_62 = arith.constant 240 : i32
    %420 = tpu.dynamic_rotate %419 by %c240_i32_62 dim 1 : vector<1x256xf32>, i32 -> vector<1x256xf32>
    %c11_63 = arith.constant 11 : index
    %c0_64 = arith.constant 0 : index
    %421 = vector.load %arg2[%c11_63, %c0_64] : memref<14x256xf32, #tpu.memory_space<vmem>>, vector<1x256xf32>
    %422 = arith.mulf %420, %421 : vector<1x256xf32>
    %423 = arith.addf %392, %422 : vector<1x256xf32>
    %c84 = arith.constant 84 : index
    %424 = memref.load %arg3[%c84] : memref<98xf32, #tpu.memory_space<smem>>
    %425 = vector.broadcast %424 : f32 to vector<1x256xf32>
    %426 = arith.mulf %256, %425 : vector<1x256xf32>
    %c85 = arith.constant 85 : index
    %427 = memref.load %arg3[%c85] : memref<98xf32, #tpu.memory_space<smem>>
    %428 = vector.broadcast %427 : f32 to vector<1x256xf32>
    %429 = arith.mulf %259, %428 : vector<1x256xf32>
    %430 = arith.addf %426, %429 : vector<1x256xf32>
    %c86 = arith.constant 86 : index
    %431 = memref.load %arg3[%c86] : memref<98xf32, #tpu.memory_space<smem>>
    %432 = vector.broadcast %431 : f32 to vector<1x256xf32>
    %433 = arith.mulf %262, %432 : vector<1x256xf32>
    %434 = arith.addf %430, %433 : vector<1x256xf32>
    %c87 = arith.constant 87 : index
    %435 = memref.load %arg3[%c87] : memref<98xf32, #tpu.memory_space<smem>>
    %436 = vector.broadcast %435 : f32 to vector<1x256xf32>
    %437 = arith.mulf %20, %436 : vector<1x256xf32>
    %438 = arith.addf %434, %437 : vector<1x256xf32>
    %c88 = arith.constant 88 : index
    %439 = memref.load %arg3[%c88] : memref<98xf32, #tpu.memory_space<smem>>
    %440 = vector.broadcast %439 : f32 to vector<1x256xf32>
    %441 = arith.mulf %265, %440 : vector<1x256xf32>
    %442 = arith.addf %438, %441 : vector<1x256xf32>
    %c89 = arith.constant 89 : index
    %443 = memref.load %arg3[%c89] : memref<98xf32, #tpu.memory_space<smem>>
    %444 = vector.broadcast %443 : f32 to vector<1x256xf32>
    %445 = arith.mulf %268, %444 : vector<1x256xf32>
    %446 = arith.addf %442, %445 : vector<1x256xf32>
    %c90 = arith.constant 90 : index
    %447 = memref.load %arg3[%c90] : memref<98xf32, #tpu.memory_space<smem>>
    %448 = vector.broadcast %447 : f32 to vector<1x256xf32>
    %449 = arith.mulf %271, %448 : vector<1x256xf32>
    %450 = arith.addf %446, %449 : vector<1x256xf32>
    %c224_i32_65 = arith.constant 224 : i32
    %451 = tpu.dynamic_rotate %450 by %c224_i32_65 dim 1 : vector<1x256xf32>, i32 -> vector<1x256xf32>
    %c12_66 = arith.constant 12 : index
    %c0_67 = arith.constant 0 : index
    %452 = vector.load %arg2[%c12_66, %c0_67] : memref<14x256xf32, #tpu.memory_space<vmem>>, vector<1x256xf32>
    %453 = arith.mulf %451, %452 : vector<1x256xf32>
    %454 = arith.addf %423, %453 : vector<1x256xf32>
    %c91 = arith.constant 91 : index
    %455 = memref.load %arg3[%c91] : memref<98xf32, #tpu.memory_space<smem>>
    %456 = vector.broadcast %455 : f32 to vector<1x256xf32>
    %457 = arith.mulf %256, %456 : vector<1x256xf32>
    %c92 = arith.constant 92 : index
    %458 = memref.load %arg3[%c92] : memref<98xf32, #tpu.memory_space<smem>>
    %459 = vector.broadcast %458 : f32 to vector<1x256xf32>
    %460 = arith.mulf %259, %459 : vector<1x256xf32>
    %461 = arith.addf %457, %460 : vector<1x256xf32>
    %c93 = arith.constant 93 : index
    %462 = memref.load %arg3[%c93] : memref<98xf32, #tpu.memory_space<smem>>
    %463 = vector.broadcast %462 : f32 to vector<1x256xf32>
    %464 = arith.mulf %262, %463 : vector<1x256xf32>
    %465 = arith.addf %461, %464 : vector<1x256xf32>
    %c94 = arith.constant 94 : index
    %466 = memref.load %arg3[%c94] : memref<98xf32, #tpu.memory_space<smem>>
    %467 = vector.broadcast %466 : f32 to vector<1x256xf32>
    %468 = arith.mulf %20, %467 : vector<1x256xf32>
    %469 = arith.addf %465, %468 : vector<1x256xf32>
    %c95 = arith.constant 95 : index
    %470 = memref.load %arg3[%c95] : memref<98xf32, #tpu.memory_space<smem>>
    %471 = vector.broadcast %470 : f32 to vector<1x256xf32>
    %472 = arith.mulf %265, %471 : vector<1x256xf32>
    %473 = arith.addf %469, %472 : vector<1x256xf32>
    %c96 = arith.constant 96 : index
    %474 = memref.load %arg3[%c96] : memref<98xf32, #tpu.memory_space<smem>>
    %475 = vector.broadcast %474 : f32 to vector<1x256xf32>
    %476 = arith.mulf %268, %475 : vector<1x256xf32>
    %477 = arith.addf %473, %476 : vector<1x256xf32>
    %c97 = arith.constant 97 : index
    %478 = memref.load %arg3[%c97] : memref<98xf32, #tpu.memory_space<smem>>
    %479 = vector.broadcast %478 : f32 to vector<1x256xf32>
    %480 = arith.mulf %271, %479 : vector<1x256xf32>
    %481 = arith.addf %477, %480 : vector<1x256xf32>
    %c208_i32_68 = arith.constant 208 : i32
    %482 = tpu.dynamic_rotate %481 by %c208_i32_68 dim 1 : vector<1x256xf32>, i32 -> vector<1x256xf32>
    %c13_69 = arith.constant 13 : index
    %c0_70 = arith.constant 0 : index
    %483 = vector.load %arg2[%c13_69, %c0_70] : memref<14x256xf32, #tpu.memory_space<vmem>>, vector<1x256xf32>
    %484 = arith.mulf %482, %483 : vector<1x256xf32>
    %485 = arith.addf %454, %484 : vector<1x256xf32>
    %486 = vector.broadcast %0 : f32 to vector<1x256xf32>
    %487 = arith.mulf %485, %486 : vector<1x256xf32>
    %488 = vector.broadcast %1 : f32 to vector<1x256xf32>
    %489 = arith.addf %487, %488 : vector<1x256xf32>
    %490 = math.absf %489 : vector<1x256xf32>
    %cst_71 = arith.constant 0.000000e+00 : f32
    %491 = vector.broadcast %cst_71 : f32 to vector<1x256xf32>
    %492 = arith.subf %491, %490 : vector<1x256xf32>
    %493 = math.exp %492 : vector<1x256xf32>
    %cst_72 = arith.constant 0.000000e+00 : f32
    %494 = vector.broadcast %cst_72 : f32 to vector<1x256xf32>
    %495 = arith.cmpf oge, %489, %494 : vector<1x256xf32>
    %cst_73 = arith.constant 1.000000e+00 : f32
    %496 = vector.broadcast %cst_73 : f32 to vector<1x256xf32>
    %497 = arith.select %495, %496, %493 : vector<1x256xi1>, vector<1x256xf32>
    %cst_74 = arith.constant 1.000000e+00 : f32
    %498 = vector.broadcast %cst_74 : f32 to vector<1x256xf32>
    %499 = arith.addf %498, %493 : vector<1x256xf32>
    %500 = arith.divf %497, %499 : vector<1x256xf32>
    %501 = arith.index_cast %2 : i32 to index
    %c0_75 = arith.constant 0 : index
    %c0_76 = arith.constant 0 : index
    %502 = vector.load %arg1[%501, %c0_75, %c0_76] : memref<1x4x256xf32, #tpu.memory_space<vmem>>, vector<1x1x256xf32>
    %503 = vector.shape_cast %502 : vector<1x1x256xf32> to vector<1x256xf32>
    %504 = arith.mulf %503, %500 : vector<1x256xf32>
    %505 = arith.index_cast %2 : i32 to index
    %c0_77 = arith.constant 0 : index
    %c0_78 = arith.constant 0 : index
    %506 = vector.load %arg5[%505, %c0_77, %c0_78] : memref<1x4x256xf32, #tpu.memory_space<vmem>>, vector<1x1x256xf32>
    %507 = vector.shape_cast %506 : vector<1x1x256xf32> to vector<1x256xf32>
    %508 = vector.shape_cast %504 : vector<1x256xf32> to vector<1x1x256xf32>
    tpu.vector_store %arg5[%505, %c0_77, %c0_78], %508 {strides = array<i32>} : memref<1x4x256xf32, #tpu.memory_space<vmem>>, vector<1x1x256xf32>,
    %509 = arith.index_cast %2 : i32 to index
    %c1_79 = arith.constant 1 : index
    %c0_80 = arith.constant 0 : index
    %510 = vector.load %arg1[%509, %c1_79, %c0_80] : memref<1x4x256xf32, #tpu.memory_space<vmem>>, vector<1x1x256xf32>
    %511 = vector.shape_cast %510 : vector<1x1x256xf32> to vector<1x256xf32>
    %512 = arith.mulf %511, %500 : vector<1x256xf32>
    %513 = arith.index_cast %2 : i32 to index
    %c1_81 = arith.constant 1 : index
    %c0_82 = arith.constant 0 : index
    %514 = vector.load %arg5[%513, %c1_81, %c0_82] : memref<1x4x256xf32, #tpu.memory_space<vmem>>, vector<1x1x256xf32>
    %515 = vector.shape_cast %514 : vector<1x1x256xf32> to vector<1x256xf32>
    %516 = vector.shape_cast %512 : vector<1x256xf32> to vector<1x1x256xf32>
    tpu.vector_store %arg5[%513, %c1_81, %c0_82], %516 {strides = array<i32>} : memref<1x4x256xf32, #tpu.memory_space<vmem>>, vector<1x1x256xf32>,
    %517 = arith.index_cast %2 : i32 to index
    %c2_83 = arith.constant 2 : index
    %c0_84 = arith.constant 0 : index
    %518 = vector.load %arg1[%517, %c2_83, %c0_84] : memref<1x4x256xf32, #tpu.memory_space<vmem>>, vector<1x1x256xf32>
    %519 = vector.shape_cast %518 : vector<1x1x256xf32> to vector<1x256xf32>
    %520 = arith.mulf %519, %500 : vector<1x256xf32>
    %521 = arith.index_cast %2 : i32 to index
    %c2_85 = arith.constant 2 : index
    %c0_86 = arith.constant 0 : index
    %522 = vector.load %arg5[%521, %c2_85, %c0_86] : memref<1x4x256xf32, #tpu.memory_space<vmem>>, vector<1x1x256xf32>
    %523 = vector.shape_cast %522 : vector<1x1x256xf32> to vector<1x256xf32>
    %524 = vector.shape_cast %520 : vector<1x256xf32> to vector<1x1x256xf32>
    tpu.vector_store %arg5[%521, %c2_85, %c0_86], %524 {strides = array<i32>} : memref<1x4x256xf32, #tpu.memory_space<vmem>>, vector<1x1x256xf32>,
    %525 = arith.index_cast %2 : i32 to index
    %c3_87 = arith.constant 3 : index
    %c0_88 = arith.constant 0 : index
    %526 = vector.load %arg1[%525, %c3_87, %c0_88] : memref<1x4x256xf32, #tpu.memory_space<vmem>>, vector<1x1x256xf32>
    %527 = vector.shape_cast %526 : vector<1x1x256xf32> to vector<1x256xf32>
    %528 = arith.mulf %527, %500 : vector<1x256xf32>
    %529 = arith.index_cast %2 : i32 to index
    %c3_89 = arith.constant 3 : index
    %c0_90 = arith.constant 0 : index
    %530 = vector.load %arg5[%529, %c3_89, %c0_90] : memref<1x4x256xf32, #tpu.memory_space<vmem>>, vector<1x1x256xf32>
    %531 = vector.shape_cast %530 : vector<1x1x256xf32> to vector<1x256xf32>
    %532 = vector.shape_cast %528 : vector<1x256xf32> to vector<1x1x256xf32>
    tpu.vector_store %arg5[%529, %c3_89, %c0_90], %532 {strides = array<i32>} : memref<1x4x256xf32, #tpu.memory_space<vmem>>, vector<1x1x256xf32>,
    %c1_i32_91 = arith.constant 1 : i32
    return
  }
  func.func @transform_0(%arg0: i32) -> (i32, i32, i32) {
    %c0_i32 = arith.constant 0 : i32
    %c0_i32_0 = arith.constant 0 : i32
    %c0_i32_1 = arith.constant 0 : i32
    return %arg0, %c0_i32, %c0_i32_0 : i32, i32, i32
  }
  func.func @transform_1(%arg0: i32) -> (i32, i32) {
    %c0_i32 = arith.constant 0 : i32
    %c0_i32_0 = arith.constant 0 : i32
    %c0_i32_1 = arith.constant 0 : i32
    return %c0_i32, %c0_i32_0 : i32, i32
  }
  func.func @transform_2(%arg0: i32) -> i32 {
    %c0_i32 = arith.constant 0 : i32
    %c0_i32_0 = arith.constant 0 : i32
    return %c0_i32 : i32
  }
  func.func @transform_3(%arg0: i32) -> i32 {
    %c0_i32 = arith.constant 0 : i32
    %c0_i32_0 = arith.constant 0 : i32
    return %c0_i32 : i32
  }
  func.func @transform_4(%arg0: i32) -> (i32, i32, i32) {
    %c0_i32 = arith.constant 0 : i32
    %c0_i32_0 = arith.constant 0 : i32
    %c0_i32_1 = arith.constant 0 : i32
    return %arg0, %c0_i32, %c0_i32_0 : i32, i32, i32
  }
}

</mosaic_0001>

<llo_original>
// kernel: tpu_custom_call.1
$region0: #{tpu_custom_call.1}
  #allocation0 [shape = 'u32[]', space=smem, size = 0x4, offset = 0x4, fixed_abs, tag = 'smem constant byte address 0x4 - core index']
  #allocation1 [shape = 'u32[144,128]{1,0:T(1,128)}', space=vmem, size = 0x12000, scoped, tag = 'internal scratch']
  %s0 = inlined_call_operand.hbm [shape: f32[2,4,256], index: 0, kind: input, shape index: {}]
  %s1 = inlined_call_operand.hbm [shape: f32[14,256], index: 1, kind: input, shape index: {}]
  %s2 = inlined_call_operand.vmem [shape: f32[98], index: 2, kind: input, shape index: {}]
  %s3 = inlined_call_operand.vmem [shape: f32[2], index: 3, kind: input, shape index: {}]
  %s4 = inlined_call_operand.hbm [shape: f32[2,4,256], index: 4, kind: output, shape index: {}]
  %s5 = sld [smem:[#allocation0]]
  $region65: #{tpu_custom_call.1} parent=0
    _
  %s7 = ssub.s32 1, %s5
  %s8 = scalar_select 0, %s7, %s5
  $region1: #{tpu_custom_call.1} parent=0
    #allocation2 [shape = 'u8[8192]{0}', space=vmem, size = 0x2000, scoped, tag = 'input window, operand 0']
    #allocation3 [shape = 's32[2]{0}', space=sflag, size = 0x8, scoped, tag = 'scoped memory for tpu_custom_call.1']
    #allocation4 [shape = 's32[2]{0}', space=sflag, size = 0x8, scoped, tag = 'scoped memory for tpu_custom_call.1']
    #allocation5 [shape = 's32[2]{0}', space=sflag, size = 0x8, scoped, tag = 'scoped memory for tpu_custom_call.1']
    #allocation6 [shape = 'u8[16384]{0}', space=vmem, size = 0x4000, scoped, tag = 'input window, operand 1, single buffered']
    #allocation7 [shape = 's32[1]{0}', space=sflag, size = 0x4, scoped, tag = 'scoped memory for tpu_custom_call.1']
    #allocation8 [shape = 'u8[512]{0}', space=smem, size = 0x200, scoped, tag = 'input window, operand 2, single buffered']
    #allocation9 [shape = 'u8[512]{0}', space=smem, size = 0x200, scoped, tag = 'input window, operand 3, single buffered']
    #allocation10 [shape = 's32[1]{0}', space=sflag, size = 0x4, scoped, tag = 'scoped memory for tpu_custom_call.1']
    #allocation11 [shape = 'u8[8192]{0}', space=vmem, size = 0x2000, scoped, tag = 'output window, operand 0']
    %9 = vsyncpa [#allocation3], 0
    %s10 = scalar_lea.sflag [#allocation3], 1
    %11 = vsyncpa %s10, 0
    %12 = vsyncpa [#allocation7], 0
    %13 = vsyncpa [#allocation5], 0
    %14 = vsyncpa [#allocation10], 0
    %15 = vsyncpa [#allocation4], 0
    %s16 = scalar_lea.sflag [#allocation4], 1
    %17 = vsyncpa %s16, 0
    loop: start=0, step=1, limit=4
    $region2: #{tpu_custom_call.1} parent=1 // loop_pre_header
      _
    $region3: #{tpu_custom_call.1} parent=1 // loop_header
      %s19 = sphi 0, %s23
      %p20 = scmp.ge.s32.totalorder %s19, 4
      %s29 = sphi 0, %s31
      %s32 = sphi 0, %s29
      %s33 = sphi 0, %s32
      %s49 = sphi 0, %s33
      %s53 = sphi 0, %s53
      %s55 = sphi 0, %s53
      %s56 = sphi 0, %s55
      %s70 = sphi 0, %s56
      %s74 = sphi 0, %s74
      %s76 = sphi 0, %s74
      %s77 = sphi 0, %s76
      %s91 = sphi 0, %s77
      %s95 = sphi 0, %s95
      %s97 = sphi 0, %s95
      %s98 = sphi 0, %s97
      %s112 = sphi 0, %s98
      %s118 = sphi 0, %s120
      %s121 = sphi 0, %s118
      %s122 = sphi 0, %s121
      %s138 = sphi 0, %s122
    $region4: #{tpu_custom_call.1} parent=1 // loop_header_branch
      %22 = sbr.rel (%p20) target = $region8
    $region5: #{tpu_custom_call.1} parent=1 // loop_body
      %s24 = ssub.s32 %s19, 1
      %s25 = ssub.s32 %s19, 2
      %s26 = sadd.s32 %s19, 1
      %s27 = ssub.s32 %s19, %s26
      %p28 = scmp.eq.s32.totalorder %s27, 0
      %s30 = sadd.s32 %s29, 1
      %s31 = scalar_select %p28, %s29, %s30
      %p34 = pneg %p28
      %p35 = scmp.eq.s32.totalorder %s19, 1
      %p36 = por %p34, %p35
      %p37 = scmp.ne.s32.totalorder %s29, %s32
      %p38 = scmp.eq.s32.totalorder %s19, 0
      %p39 = por %p37, %p38
      %p40 = scmp.ne.s32.totalorder %s29, %s32
      %p41 = scmp.eq.s32.totalorder %s24, 1
      %p42 = por %p40, %p41
      %p43 = scmp.ne.s32.totalorder %s32, %s33
      %p44 = scmp.eq.s32.totalorder %s24, 0
      %p45 = por %p43, %p44
      %p46 = scmp.ne.s32.totalorder %s32, %s33
      %p47 = scmp.eq.s32.totalorder %s25, 1
      %p48 = por %p46, %p47
      %p50 = scmp.ne.s32.totalorder %s33, %s49
      %p51 = scmp.eq.s32.totalorder %s25, 0
      %p52 = por %p50, %p51
      %s54 = sadd.s32 %s53, 1
      %p57 = scmp.eq.s32.totalorder %s19, 1
      %p58 = scmp.ne.s32.totalorder %s53, %s55
      %p59 = scmp.eq.s32.totalorder %s19, 0
      %p60 = por %p58, %p59
      %p61 = scmp.ne.s32.totalorder %s53, %s55
      %p62 = scmp.eq.s32.totalorder %s24, 1
      %p63 = por %p61, %p62
      %p64 = scmp.ne.s32.totalorder %s55, %s56
      %p65 = scmp.eq.s32.totalorder %s24, 0
      %p66 = por %p64, %p65
      %p67 = scmp.ne.s32.totalorder %s55, %s56
      %p68 = scmp.eq.s32.totalorder %s25, 1
      %p69 = por %p67, %p68
      %p71 = scmp.ne.s32.totalorder %s56, %s70
      %p72 = scmp.eq.s32.totalorder %s25, 0
      %p73 = por %p71, %p72
      %s75 = sadd.s32 %s74, 1
      %p78 = scmp.eq.s32.totalorder %s19, 1
      %p79 = scmp.ne.s32.totalorder %s74, %s76
      %p80 = scmp.eq.s32.totalorder %s19, 0
      %p81 = por %p79, %p80
      %p82 = scmp.ne.s32.totalorder %s74, %s76
      %p83 = scmp.eq.s32.totalorder %s24, 1
      %p84 = por %p82, %p83
      %p85 = scmp.ne.s32.totalorder %s76, %s77
      %p86 = scmp.eq.s32.totalorder %s24, 0
      %p87 = por %p85, %p86
      %p88 = scmp.ne.s32.totalorder %s76, %s77
      %p89 = scmp.eq.s32.totalorder %s25, 1
      %p90 = por %p88, %p89
      %p92 = scmp.ne.s32.totalorder %s77, %s91
      %p93 = scmp.eq.s32.totalorder %s25, 0
      %p94 = por %p92, %p93
      %s96 = sadd.s32 %s95, 1
      %p99 = scmp.eq.s32.totalorder %s19, 1
      %p100 = scmp.ne.s32.totalorder %s95, %s97
      %p101 = scmp.eq.s32.totalorder %s19, 0
      %p102 = por %p100, %p101
      %p103 = scmp.ne.s32.totalorder %s95, %s97
      %p104 = scmp.eq.s32.totalorder %s24, 1
      %p105 = por %p103, %p104
      %p106 = scmp.ne.s32.totalorder %s97, %s98
      %p107 = scmp.eq.s32.totalorder %s24, 0
      %p108 = por %p106, %p107
      %p109 = scmp.ne.s32.totalorder %s97, %s98
      %p110 = scmp.eq.s32.totalorder %s25, 1
      %p111 = por %p109, %p110
      %p113 = scmp.ne.s32.totalorder %s98, %s112
      %p114 = scmp.eq.s32.totalorder %s25, 0
      %p115 = por %p113, %p114
      %s116 = ssub.s32 %s19, %s26
      %p117 = scmp.eq.s32.totalorder %s116, 0
      %s119 = sadd.s32 %s118, 1
      %s120 = scalar_select %p117, %s118, %s119
      %p123 = pneg %p117
      %p124 = scmp.eq.s32.totalorder %s19, 1
      %p125 = por %p123, %p124
      %p126 = scmp.ne.s32.totalorder %s118, %s121
      %p127 = scmp.eq.s32.totalorder %s19, 0
      %p128 = por %p126, %p127
      %p129 = scmp.ne.s32.totalorder %s118, %s121
      %p130 = scmp.eq.s32.totalorder %s24, 1
      %p131 = por %p129, %p130
      %p132 = scmp.ne.s32.totalorder %s121, %s122
      %p133 = scmp.eq.s32.totalorder %s24, 0
      %p134 = por %p132, %p133
      %p135 = scmp.ne.s32.totalorder %s121, %s122
      %p136 = scmp.eq.s32.totalorder %s25, 1
      %p137 = por %p135, %p136
      %p139 = scmp.ne.s32.totalorder %s122, %s138
      %p140 = scmp.eq.s32.totalorder %s25, 0
      %p141 = por %p139, %p140
      %p142 = scmp.le.s32.totalorder 1, %s19
      %p143 = scmp.lt.s32.totalorder %s19, 3
      %p144 = pnand %p142, %p143
      %p145 = pneg %p144
      // Predicated region
      $region9: #{tpu_custom_call.1} parent=5 // pred_check
        _
      $region10: #{tpu_custom_call.1} parent=5 // pred_check_branch
        %147 = sbr.rel (%p144) target = $region12
      $region11: #{tpu_custom_call.1} parent=5 // pred_region
        %s148 = ssub.s32 %s19, 1
        // Predicated region
        $region13: #{tpu_custom_call.1} parent=11 // pred_check
          %p149 = pneg %p66
        $region14: #{tpu_custom_call.1} parent=11 // pred_check_branch
          %151 = sbr.rel (%p149) target = $region16
        $region15: #{tpu_custom_call.1} parent=11 // pred_region
          %s153 = ssub.s32 512, 512
          %154 = vsyncadd [#allocation7], %s153
          %s155 = sshll.u32 [#allocation6], 4
          %s156 = int_to_ptr.vmem [resolvable:$true] %s155
          %161 = dma.hbm_to_vmem [thread:$0]  %s1, 512, %s156, [#allocation7], 256, 256, 16
        $region16: #{tpu_custom_call.1} parent=11 // pred_fallthru
          _
        // Predicated region
        $region17: #{tpu_custom_call.1} parent=11 // pred_check
          %p162 = pneg %p87
        $region18: #{tpu_custom_call.1} parent=11 // pred_check_branch
          %164 = sbr.rel (%p162) target = $region20
        $region19: #{tpu_custom_call.1} parent=11 // pred_region
          %s166 = ssub.s32 16, 16
          %167 = vsyncadd [#allocation5], %s166
          %s169 = sshll.u32 %s2, 4
          %s170 = int_to_ptr.vmem [resolvable:$true] %s169
          %172 = dma.vmem_to_smem %s170, 16, [#allocation8], [#allocation5]
        $region20: #{tpu_custom_call.1} parent=11 // pred_fallthru
          _
        // Predicated region
        $region21: #{tpu_custom_call.1} parent=11 // pred_check
          %p173 = pneg %p108
        $region22: #{tpu_custom_call.1} parent=11 // pred_check_branch
          %175 = sbr.rel (%p173) target = $region24
        $region23: #{tpu_custom_call.1} parent=11 // pred_region
          %s177 = ssub.s32 16, 16
          %178 = vsyncadd [#allocation10], %s177
          %s180 = sshll.u32 %s3, 4
          %s181 = int_to_ptr.vmem [resolvable:$true] %s180
          %183 = dma.vmem_to_smem %s181, 16, [#allocation9], [#allocation10]
        $region24: #{tpu_custom_call.1} parent=11 // pred_fallthru
          _
      $region12: #{tpu_custom_call.1} parent=5 // pred_fallthru
        _
      %p184 = scmp.lt.s32.totalorder %s19, 2
      // Predicated region
      $region25: #{tpu_custom_call.1} parent=5 // pred_check
        %p185 = pneg %p184
      $region26: #{tpu_custom_call.1} parent=5 // pred_check_branch
        %187 = sbr.rel (%p185) target = $region28
      $region27: #{tpu_custom_call.1} parent=5 // pred_region
        // Predicated region
        $region29: #{tpu_custom_call.1} parent=27 // pred_check
          %p188 = pneg %p39
        $region30: #{tpu_custom_call.1} parent=27 // pred_check_branch
          %190 = sbr.rel (%p188) target = $region32
        $region31: #{tpu_custom_call.1} parent=27 // pred_region
          %s191 = sand.u32 %s29, 1
          %s192 = scalar_lea.sflag [#allocation3], %s191
          %s193 = sand.u32 %s29, 1
          %s194 = smul.addr %s193, 8
          %s195 = scalar_lea.vmem [#allocation2], %s194
          %s197 = ssub.s32 128, 128
          %198 = vsyncadd %s192, %s197
          %s199 = smul.addr %s19, 2
          %s200 = smul.addr %s199, 64
          %s201 = scalar_lea.hbm %s0, %s200
          %s203 = sshll.u32 %s195, 4
          %s204 = int_to_ptr.vmem [resolvable:$true] %s203
          %206 = dma.hbm_to_vmem [thread:$0]  %s201, 128, %s204, %s192
        $region32: #{tpu_custom_call.1} parent=27 // pred_fallthru
          _
      $region28: #{tpu_custom_call.1} parent=5 // pred_fallthru
        _
      %p207 = scmp.le.s32.totalorder 1, %s19
      %p208 = scmp.lt.s32.totalorder %s19, 3
      %p209 = pnand %p207, %p208
      %p210 = pneg %p209
      // Predicated region
      $region33: #{tpu_custom_call.1} parent=5 // pred_check
        _
      $region34: #{tpu_custom_call.1} parent=5 // pred_check_branch
        %212 = sbr.rel (%p209) target = $region36
      $region35: #{tpu_custom_call.1} parent=5 // pred_region
        %s213 = ssub.s32 %s19, 1
        %s214 = sand.u32 %s32, 1
        %s215 = scalar_lea.sflag [#allocation3], %s214
        %s216 = sand.u32 %s32, 1
        %s217 = smul.addr %s216, 8
        %s218 = scalar_lea.vmem [#allocation2], %s217
        // Predicated region
        $region37: #{tpu_custom_call.1} parent=35 // pred_check
          %p219 = pneg %p45
        $region38: #{tpu_custom_call.1} parent=35 // pred_check_branch
          %221 = sbr.rel (%p219) target = $region40
        $region39: #{tpu_custom_call.1} parent=35 // pred_region
          %222 = dma.done %s215, 128
        $region40: #{tpu_custom_call.1} parent=35 // pred_fallthru
          _
        // Predicated region
        $region41: #{tpu_custom_call.1} parent=35 // pred_check
          %p223 = pneg %p66
        $region42: #{tpu_custom_call.1} parent=35 // pred_check_branch
          %225 = sbr.rel (%p223) target = $region44
        $region43: #{tpu_custom_call.1} parent=35 // pred_region
          %226 = dma.done [#allocation7], 512
        $region44: #{tpu_custom_call.1} parent=35 // pred_fallthru
          _
        // Predicated region
        $region45: #{tpu_custom_call.1} parent=35 // pred_check
          %p227 = pneg %p87
        $region46: #{tpu_custom_call.1} parent=35 // pred_check_branch
          %229 = sbr.rel (%p227) target = $region48
        $region47: #{tpu_custom_call.1} parent=35 // pred_region
          %230 = dma.done [#allocation5], 16
        $region48: #{tpu_custom_call.1} parent=35 // pred_fallthru
          _
        // Predicated region
        $region49: #{tpu_custom_call.1} parent=35 // pred_check
          %p231 = pneg %p108
        $region50: #{tpu_custom_call.1} parent=35 // pred_check_branch
          %233 = sbr.rel (%p231) target = $region52
        $region51: #{tpu_custom_call.1} parent=35 // pred_region
          %234 = dma.done [#allocation10], 16
        $region52: #{tpu_custom_call.1} parent=35 // pred_fallthru
          _
        %235 = sfence
        %s236 = sand.u32 %s32, 1
        %s237 = scalar_lea.sflag [#allocation3], %s236
        %s238 = sand.u32 %s32, 1
        %s239 = smul.addr %s238, 8
        %s240 = scalar_lea.vmem [#allocation2], %s239
        %p241 = pneg %p45
        %p242 = pneg %p42
        %p243 = pneg %p66
        %p244 = pneg %p63
        %p245 = pneg %p87
        %p246 = pneg %p84
        %p247 = pneg %p108
        %p248 = pneg %p105
        %p249 = pneg %p134
        %p250 = pneg %p131
        %s251 = sand.u32 %s121, 1
        %s252 = scalar_lea.sflag [#allocation4], %s251
        %s253 = sand.u32 %s121, 1
        %s254 = smul.addr %s253, 8
        %s255 = scalar_lea.vmem [#allocation11], %s254
        %s256 = sld [smem:[#allocation9]]
        %s257 = sld [smem:[#allocation9 + $0x1]]
        %v258 = vld [vmem:[%s218] ss:$4 sm:$0x3]
        %s259 = scalar_lea.vmem %s218, 1 [#allocation2]
        %v260 = vld [vmem:[%s259] ss:$4 sm:$0x3]
        %v261 = vmax.f32 %v258, %v260
        %v262 = vadd.f32 %v258, %v260
        %s263 = scalar_lea.vmem %s218, 2 [#allocation2]
        %v264 = vld [vmem:[%s263] ss:$4 sm:$0x3]
        %v265 = vmax.f32 %v261, %v264
        %v266 = vadd.f32 %v262, %v264
        %s267 = scalar_lea.vmem %s218, 3 [#allocation2]
        %v268 = vld [vmem:[%s267] ss:$4 sm:$0x3]
        %v269 = vmax.f32 %v265, %v268
        %v270 = vadd.f32 %v266, %v268
        %v272 = vlaneseq
        %v273 = vshrl.u32 %v272, 7
        %v274 = vsub.s32 0, %v273
        %v275 = vrot.slane %v269, %v274
        %v276 = vlaneseq
        %v277 = vshrl.u32 %v276, 7
        %v278 = vsub.s32 1, %v277
        %v279 = vrot.slane %v269, %v278
        %282 = vrot.lane.b32.xlu0 %v275, 3
        %v283 = vpop.permute.xlu0 %282
        %284 = vrot.lane.b32.xlu0 %v279, 3
        %v285 = vpop.permute.xlu0 %284
        %v286 = vlaneseq
        %v287 = vand.u32 %v286, 127
        %vm288 = vcmp.lt.s32.totalorder %v287, 3
        %v289 = vsel %vm288, %v283, %v285
        %v290 = vsel %vm288, %v285, %v283
        %v291 = vld [vmem:[#allocation6] ss:$8 sm:$0x3]
        %v293 = vlaneseq
        %v294 = vshrl.u32 %v293, 7
        %v295 = vsub.s32 0, %v294
        %v296 = vrot.slane %v291, %v295
        %v297 = vlaneseq
        %v298 = vshrl.u32 %v297, 7
        %v299 = vsub.s32 1, %v298
        %v300 = vrot.slane %v291, %v299
        %v303 = vmul.f32 %v290, %v296
        %v304 = vmul.f32 %v289, %v300
        %305 = vrot.lane.b32.xlu0 %v275, 2
        %v306 = vpop.permute.xlu0 %305
        %307 = vrot.lane.b32.xlu0 %v279, 2
        %v308 = vpop.permute.xlu0 %307
        %vm309 = vcmp.lt.s32.totalorder %v287, 2
        %v310 = vsel %vm309, %v306, %v308
        %v311 = vsel %vm309, %v308, %v306
        %s312 = scalar_lea.vmem [#allocation6], 1
        %v313 = vld [vmem:[%s312] ss:$8 sm:$0x3]
        %v315 = vlaneseq
        %v316 = vshrl.u32 %v315, 7
        %v317 = vsub.s32 0, %v316
        %v318 = vrot.slane %v313, %v317
        %v319 = vlaneseq
        %v320 = vshrl.u32 %v319, 7
        %v321 = vsub.s32 1, %v320
        %v322 = vrot.slane %v313, %v321
        %v325 = vmul.f32 %v311, %v318
        %v326 = vmul.f32 %v310, %v322
        %327 = vrot.lane.b32.xlu0 %v275, 1
        %v328 = vpop.permute.xlu0 %327
        %329 = vrot.lane.b32.xlu0 %v279, 1
        %v330 = vpop.permute.xlu0 %329
        %vm331 = vcmp.lt.s32.totalorder %v287, 1
        %v332 = vsel %vm331, %v328, %v330
        %v333 = vsel %vm331, %v330, %v328
        %s334 = scalar_lea.vmem [#allocation6], 2
        %v335 = vld [vmem:[%s334] ss:$8 sm:$0x3]
        %v337 = vlaneseq
        %v338 = vshrl.u32 %v337, 7
        %v339 = vsub.s32 0, %v338
        %v340 = vrot.slane %v335, %v339
        %v341 = vlaneseq
        %v342 = vshrl.u32 %v341, 7
        %v343 = vsub.s32 1, %v342
        %v344 = vrot.slane %v335, %v343
        %v347 = vmul.f32 %v333, %v340
        %v348 = vmul.f32 %v332, %v344
        %349 = vrot.lane.b32.xlu0 %v275, 127
        %v350 = vpop.permute.xlu0 %349
        %351 = vrot.lane.b32.xlu0 %v279, 127
        %v352 = vpop.permute.xlu0 %351
        %vm353 = vcmp.lt.s32.totalorder %v287, 127
        %v354 = vsel %vm353, %v350, %v352
        %v355 = vsel %vm353, %v352, %v350
        %s356 = scalar_lea.vmem [#allocation6], 4
        %v357 = vld [vmem:[%s356] ss:$8 sm:$0x3]
        %v359 = vlaneseq
        %v360 = vshrl.u32 %v359, 7
        %v361 = vsub.s32 0, %v360
        %v362 = vrot.slane %v357, %v361
        %v363 = vlaneseq
        %v364 = vshrl.u32 %v363, 7
        %v365 = vsub.s32 1, %v364
        %v366 = vrot.slane %v357, %v365
        %v369 = vmul.f32 %v354, %v362
        %v370 = vmul.f32 %v355, %v366
        %371 = vrot.lane.b32.xlu0 %v275, 126
        %v372 = vpop.permute.xlu0 %371
        %373 = vrot.lane.b32.xlu0 %v279, 126
        %v374 = vpop.permute.xlu0 %373
        %vm375 = vcmp.lt.s32.totalorder %v287, 126
        %v376 = vsel %vm375, %v372, %v374
        %v377 = vsel %vm375, %v374, %v372
        %s378 = scalar_lea.vmem [#allocation6], 5
        %v379 = vld [vmem:[%s378] ss:$8 sm:$0x3]
        %v381 = vlaneseq
        %v382 = vshrl.u32 %v381, 7
        %v383 = vsub.s32 0, %v382
        %v384 = vrot.slane %v379, %v383
        %v385 = vlaneseq
        %v386 = vshrl.u32 %v385, 7
        %v387 = vsub.s32 1, %v386
        %v388 = vrot.slane %v379, %v387
        %v391 = vmul.f32 %v376, %v384
        %v392 = vmul.f32 %v377, %v388
        %393 = vrot.lane.b32.xlu0 %v275, 125
        %v394 = vpop.permute.xlu0 %393
        %395 = vrot.lane.b32.xlu0 %v279, 125
        %v396 = vpop.permute.xlu0 %395
        %vm397 = vcmp.lt.s32.totalorder %v287, 125
        %v398 = vsel %vm397, %v394, %v396
        %v399 = vsel %vm397, %v396, %v394
        %s400 = scalar_lea.vmem [#allocation6], 6
        %v401 = vld [vmem:[%s400] ss:$8 sm:$0x3]
        %v403 = vlaneseq
        %v404 = vshrl.u32 %v403, 7
        %v405 = vsub.s32 0, %v404
        %v406 = vrot.slane %v401, %v405
        %v407 = vlaneseq
        %v408 = vshrl.u32 %v407, 7
        %v409 = vsub.s32 1, %v408
        %v410 = vrot.slane %v401, %v409
        %v413 = vmul.f32 %v398, %v406
        %v414 = vmul.f32 %v399, %v410
        %s415 = sld [smem:[#allocation8]]
        %v416 = vstv %s415
        %v417 = vmul.f32 %v303, %v416
        %v418 = vmul.f32 %v304, %v416
        %s419 = sld [smem:[#allocation8 + $0x1]]
        %v420 = vstv %s419
        %v421 = vmul.f32 %v325, %v420
        %v422 = vmul.f32 %v326, %v420
        %v423 = vadd.f32 %v417, %v421
        %v424 = vadd.f32 %v418, %v422
        %s425 = sld [smem:[#allocation8 + $0x2]]
        %v426 = vstv %s425
        %v427 = vmul.f32 %v347, %v426
        %v428 = vmul.f32 %v348, %v426
        %v429 = vadd.f32 %v423, %v427
        %v430 = vadd.f32 %v424, %v428
        %s431 = sld [smem:[#allocation8 + $0x3]]
        %v432 = vstv %s431
        %v433 = vmul.f32 %v269, %v432
        %v435 = vlaneseq
        %v436 = vshrl.u32 %v435, 7
        %v437 = vsub.s32 0, %v436
        %v438 = vrot.slane %v433, %v437
        %v439 = vlaneseq
        %v440 = vshrl.u32 %v439, 7
        %v441 = vsub.s32 1, %v440
        %v442 = vrot.slane %v433, %v441
        %v445 = vadd.f32 %v429, %v438
        %v446 = vadd.f32 %v430, %v442
        %s447 = sld [smem:[#allocation8 + $0x4]]
        %v448 = vstv %s447
        %v449 = vmul.f32 %v369, %v448
        %v450 = vmul.f32 %v370, %v448
        %v451 = vadd.f32 %v445, %v449
        %v452 = vadd.f32 %v446, %v450
        %s453 = sld [smem:[#allocation8 + $0x5]]
        %v454 = vstv %s453
        %v455 = vmul.f32 %v391, %v454
        %v456 = vmul.f32 %v392, %v454
        %v457 = vadd.f32 %v451, %v455
        %v458 = vadd.f32 %v452, %v456
        %s459 = sld [smem:[#allocation8 + $0x6]]
        %v460 = vstv %s459
        %v461 = vmul.f32 %v413, %v460
        %v462 = vmul.f32 %v414, %v460
        %v463 = vadd.f32 %v457, %v461
        %v464 = vadd.f32 %v458, %v462
        %465 = vrot.lane.b32.xlu0 %v463, 48
        %v466 = vpop.permute.xlu0 %465
        %467 = vrot.lane.b32.xlu0 %v464, 48
        %v468 = vpop.permute.xlu0 %467
        %vm469 = vcmp.lt.s32.totalorder %v287, 48
        %v470 = vsel %vm469, %v466, %v468
        %v471 = vsel %vm469, %v468, %v466
        %s472 = scalar_lea.vmem [#allocation6], 7
        %v473 = vld [vmem:[%s472] ss:$8 sm:$0x3]
        %v475 = vlaneseq
        %v476 = vshrl.u32 %v475, 7
        %v477 = vsub.s32 0, %v476
        %v478 = vrot.slane %v473, %v477
        %v479 = vlaneseq
        %v480 = vshrl.u32 %v479, 7
        %v481 = vsub.s32 1, %v480
        %v482 = vrot.slane %v473, %v481
        %v485 = vmul.f32 %v471, %v478
        %v486 = vmul.f32 %v470, %v482
        %v487 = vadd.f32 %v485, 0.0
        %v488 = vadd.f32 %v486, 0.0
        %s489 = sld [smem:[#allocation8 + $0x7]]
        %v490 = vstv %s489
        %v491 = vmul.f32 %v303, %v490
        %v492 = vmul.f32 %v304, %v490
        %s493 = sld [smem:[#allocation8 + $0x8]]
        %v494 = vstv %s493
        %v495 = vmul.f32 %v325, %v494
        %v496 = vmul.f32 %v326, %v494
        %v497 = vadd.f32 %v491, %v495
        %v498 = vadd.f32 %v492, %v496
        %s499 = sld [smem:[#allocation8 + $0x9]]
        %v500 = vstv %s499
        %v501 = vmul.f32 %v347, %v500
        %v502 = vmul.f32 %v348, %v500
        %v503 = vadd.f32 %v497, %v501
        %v504 = vadd.f32 %v498, %v502
        %s505 = sld [smem:[#allocation8 + $0xa]]
        %v506 = vstv %s505
        %v507 = vmul.f32 %v269, %v506
        %v509 = vlaneseq
        %v510 = vshrl.u32 %v509, 7
        %v511 = vsub.s32 0, %v510
        %v512 = vrot.slane %v507, %v511
        %v513 = vlaneseq
        %v514 = vshrl.u32 %v513, 7
        %v515 = vsub.s32 1, %v514
        %v516 = vrot.slane %v507, %v515
        %v519 = vadd.f32 %v503, %v512
        %v520 = vadd.f32 %v504, %v516
        %s521 = sld [smem:[#allocation8 + $0xb]]
        %v522 = vstv %s521
        %v523 = vmul.f32 %v369, %v522
        %v524 = vmul.f32 %v370, %v522
        %v525 = vadd.f32 %v519, %v523
        %v526 = vadd.f32 %v520, %v524
        %s527 = sld [smem:[#allocation8 + $0xc]]
        %v528 = vstv %s527
        %v529 = vmul.f32 %v391, %v528
        %v530 = vmul.f32 %v392, %v528
        %v531 = vadd.f32 %v525, %v529
        %v532 = vadd.f32 %v526, %v530
        %s533 = sld [smem:[#allocation8 + $0xd]]
        %v534 = vstv %s533
        %v535 = vmul.f32 %v413, %v534
        %v536 = vmul.f32 %v414, %v534
        %v537 = vadd.f32 %v531, %v535
        %v538 = vadd.f32 %v532, %v536
        %539 = vrot.lane.b32.xlu0 %v537, 32
        %v540 = vpop.permute.xlu0 %539
        %541 = vrot.lane.b32.xlu0 %v538, 32
        %v542 = vpop.permute.xlu0 %541
        %vm543 = vcmp.lt.s32.totalorder %v287, 32
        %v544 = vsel %vm543, %v540, %v542
        %v545 = vsel %vm543, %v542, %v540
        %s546 = scalar_lea.vmem [#allocation6], 16
        %v547 = vld [vmem:[%s546] ss:$8 sm:$0x3]
        %v549 = vlaneseq
        %v550 = vshrl.u32 %v549, 7
        %v551 = vsub.s32 0, %v550
        %v552 = vrot.slane %v547, %v551
        %v553 = vlaneseq
        %v554 = vshrl.u32 %v553, 7
        %v555 = vsub.s32 1, %v554
        %v556 = vrot.slane %v547, %v555
        %v559 = vmul.f32 %v545, %v552
        %v560 = vmul.f32 %v544, %v556
        %v561 = vadd.f32 %v487, %v559
        %v562 = vadd.f32 %v488, %v560
        %s563 = sld [smem:[#allocation8 + $0xe]]
        %v564 = vstv %s563
        %v565 = vmul.f32 %v303, %v564
        %v566 = vmul.f32 %v304, %v564
        %s567 = sld [smem:[#allocation8 + $0xf]]
        %v568 = vstv %s567
        %v569 = vmul.f32 %v325, %v568
        %v570 = vmul.f32 %v326, %v568
        %v571 = vadd.f32 %v565, %v569
        %v572 = vadd.f32 %v566, %v570
        %s573 = sld [smem:[#allocation8 + $0x10]]
        %v574 = vstv %s573
        %v575 = vmul.f32 %v347, %v574
        %v576 = vmul.f32 %v348, %v574
        %v577 = vadd.f32 %v571, %v575
        %v578 = vadd.f32 %v572, %v576
        %s579 = sld [smem:[#allocation8 + $0x11]]
        %v580 = vstv %s579
        %v581 = vmul.f32 %v269, %v580
        %v583 = vlaneseq
        %v584 = vshrl.u32 %v583, 7
        %v585 = vsub.s32 0, %v584
        %v586 = vrot.slane %v581, %v585
        %v587 = vlaneseq
        %v588 = vshrl.u32 %v587, 7
        %v589 = vsub.s32 1, %v588
        %v590 = vrot.slane %v581, %v589
        %v593 = vadd.f32 %v577, %v586
        %v594 = vadd.f32 %v578, %v590
        %s595 = sld [smem:[#allocation8 + $0x12]]
        %v596 = vstv %s595
        %v597 = vmul.f32 %v369, %v596
        %v598 = vmul.f32 %v370, %v596
        %v599 = vadd.f32 %v593, %v597
        %v600 = vadd.f32 %v594, %v598
        %s601 = sld [smem:[#allocation8 + $0x13]]
        %v602 = vstv %s601
        %v603 = vmul.f32 %v391, %v602
        %v604 = vmul.f32 %v392, %v602
        %v605 = vadd.f32 %v599, %v603
        %v606 = vadd.f32 %v600, %v604
        %s607 = sld [smem:[#allocation8 + $0x14]]
        %v608 = vstv %s607
        %v609 = vmul.f32 %v413, %v608
        %v610 = vmul.f32 %v414, %v608
        %v611 = vadd.f32 %v605, %v609
        %v612 = vadd.f32 %v606, %v610
        %613 = vrot.lane.b32.xlu0 %v611, 16
        %v614 = vpop.permute.xlu0 %613
        %615 = vrot.lane.b32.xlu0 %v612, 16
        %v616 = vpop.permute.xlu0 %615
        %vm617 = vcmp.lt.s32.totalorder %v287, 16
        %v618 = vsel %vm617, %v614, %v616
        %v619 = vsel %vm617, %v616, %v614
        %s620 = scalar_lea.vmem [#allocation6], 17
        %v621 = vld [vmem:[%s620] ss:$8 sm:$0x3]
        %v623 = vlaneseq
        %v624 = vshrl.u32 %v623, 7
        %v625 = vsub.s32 0, %v624
        %v626 = vrot.slane %v621, %v625
        %v627 = vlaneseq
        %v628 = vshrl.u32 %v627, 7
        %v629 = vsub.s32 1, %v628
        %v630 = vrot.slane %v621, %v629
        %v633 = vmul.f32 %v619, %v626
        %v634 = vmul.f32 %v618, %v630
        %v635 = vadd.f32 %v561, %v633
        %v636 = vadd.f32 %v562, %v634
        %s637 = sld [smem:[#allocation8 + $0x15]]
        %v638 = vstv %s637
        %v639 = vmul.f32 %v303, %v638
        %v640 = vmul.f32 %v304, %v638
        %s641 = sld [smem:[#allocation8 + $0x16]]
        %v642 = vstv %s641
        %v643 = vmul.f32 %v325, %v642
        %v644 = vmul.f32 %v326, %v642
        %v645 = vadd.f32 %v639, %v643
        %v646 = vadd.f32 %v640, %v644
        %s647 = sld [smem:[#allocation8 + $0x17]]
        %v648 = vstv %s647
        %v649 = vmul.f32 %v347, %v648
        %v650 = vmul.f32 %v348, %v648
        %v651 = vadd.f32 %v645, %v649
        %v652 = vadd.f32 %v646, %v650
        %s653 = sld [smem:[#allocation8 + $0x18]]
        %v654 = vstv %s653
        %v655 = vmul.f32 %v269, %v654
        %v657 = vlaneseq
        %v658 = vshrl.u32 %v657, 7
        %v659 = vsub.s32 0, %v658
        %v660 = vrot.slane %v655, %v659
        %v661 = vlaneseq
        %v662 = vshrl.u32 %v661, 7
        %v663 = vsub.s32 1, %v662
        %v664 = vrot.slane %v655, %v663
        %v667 = vadd.f32 %v651, %v660
        %v668 = vadd.f32 %v652, %v664
        %s669 = sld [smem:[#allocation8 + $0x19]]
        %v670 = vstv %s669
        %v671 = vmul.f32 %v369, %v670
        %v672 = vmul.f32 %v370, %v670
        %v673 = vadd.f32 %v667, %v671
        %v674 = vadd.f32 %v668, %v672
        %s675 = sld [smem:[#allocation8 + $0x1a]]
        %v676 = vstv %s675
        %v677 = vmul.f32 %v391, %v676
        %v678 = vmul.f32 %v392, %v676
        %v679 = vadd.f32 %v673, %v677
        %v680 = vadd.f32 %v674, %v678
        %s681 = sld [smem:[#allocation8 + $0x1b]]
        %v682 = vstv %s681
        %v683 = vmul.f32 %v413, %v682
        %v684 = vmul.f32 %v414, %v682
        %v685 = vadd.f32 %v679, %v683
        %v686 = vadd.f32 %v680, %v684
        %v687 = vadd.f32 %v635, %v685
        %v688 = vadd.f32 %v636, %v686
        %s689 = sld [smem:[#allocation8 + $0x1c]]
        %v690 = vstv %s689
        %v691 = vmul.f32 %v303, %v690
        %v692 = vmul.f32 %v304, %v690
        %s693 = sld [smem:[#allocation8 + $0x1d]]
        %v694 = vstv %s693
        %v695 = vmul.f32 %v325, %v694
        %v696 = vmul.f32 %v326, %v694
        %v697 = vadd.f32 %v691, %v695
        %v698 = vadd.f32 %v692, %v696
        %s699 = sld [smem:[#allocation8 + $0x1e]]
        %v700 = vstv %s699
        %v701 = vmul.f32 %v347, %v700
        %v702 = vmul.f32 %v348, %v700
        %v703 = vadd.f32 %v697, %v701
        %v704 = vadd.f32 %v698, %v702
        %s705 = sld [smem:[#allocation8 + $0x1f]]
        %v706 = vstv %s705
        %v707 = vmul.f32 %v269, %v706
        %v709 = vlaneseq
        %v710 = vshrl.u32 %v709, 7
        %v711 = vsub.s32 0, %v710
        %v712 = vrot.slane %v707, %v711
        %v713 = vlaneseq
        %v714 = vshrl.u32 %v713, 7
        %v715 = vsub.s32 1, %v714
        %v716 = vrot.slane %v707, %v715
        %v719 = vadd.f32 %v703, %v712
        %v720 = vadd.f32 %v704, %v716
        %s721 = sld [smem:[#allocation8 + $0x20]]
        %v722 = vstv %s721
        %v723 = vmul.f32 %v369, %v722
        %v724 = vmul.f32 %v370, %v722
        %v725 = vadd.f32 %v719, %v723
        %v726 = vadd.f32 %v720, %v724
        %s727 = sld [smem:[#allocation8 + $0x21]]
        %v728 = vstv %s727
        %v729 = vmul.f32 %v391, %v728
        %v730 = vmul.f32 %v392, %v728
        %v731 = vadd.f32 %v725, %v729
        %v732 = vadd.f32 %v726, %v730
        %s733 = sld [smem:[#allocation8 + $0x22]]
        %v734 = vstv %s733
        %v735 = vmul.f32 %v413, %v734
        %v736 = vmul.f32 %v414, %v734
        %v737 = vadd.f32 %v731, %v735
        %v738 = vadd.f32 %v732, %v736
        %739 = vrot.lane.b32.xlu0 %v737, 112
        %v740 = vpop.permute.xlu0 %739
        %741 = vrot.lane.b32.xlu0 %v738, 112
        %v742 = vpop.permute.xlu0 %741
        %vm743 = vcmp.lt.s32.totalorder %v287, 112
        %v744 = vsel %vm743, %v740, %v742
        %v745 = vsel %vm743, %v742, %v740
        %s746 = scalar_lea.vmem [#allocation6], 19
        %v747 = vld [vmem:[%s746] ss:$8 sm:$0x3]
        %v749 = vlaneseq
        %v750 = vshrl.u32 %v749, 7
        %v751 = vsub.s32 0, %v750
        %v752 = vrot.slane %v747, %v751
        %v753 = vlaneseq
        %v754 = vshrl.u32 %v753, 7
        %v755 = vsub.s32 1, %v754
        %v756 = vrot.slane %v747, %v755
        %v759 = vmul.f32 %v744, %v752
        %v760 = vmul.f32 %v745, %v756
        %v761 = vadd.f32 %v687, %v759
        %v762 = vadd.f32 %v688, %v760
        %s763 = sld [smem:[#allocation8 + $0x23]]
        %v764 = vstv %s763
        %v765 = vmul.f32 %v303, %v764
        %v766 = vmul.f32 %v304, %v764
        %s767 = sld [smem:[#allocation8 + $0x24]]
        %v768 = vstv %s767
        %v769 = vmul.f32 %v325, %v768
        %v770 = vmul.f32 %v326, %v768
        %v771 = vadd.f32 %v765, %v769
        %v772 = vadd.f32 %v766, %v770
        %s773 = sld [smem:[#allocation8 + $0x25]]
        %v774 = vstv %s773
        %v775 = vmul.f32 %v347, %v774
        %v776 = vmul.f32 %v348, %v774
        %v777 = vadd.f32 %v771, %v775
        %v778 = vadd.f32 %v772, %v776
        %s779 = sld [smem:[#allocation8 + $0x26]]
        %v780 = vstv %s779
        %v781 = vmul.f32 %v269, %v780
        %v783 = vlaneseq
        %v784 = vshrl.u32 %v783, 7
        %v785 = vsub.s32 0, %v784
        %v786 = vrot.slane %v781, %v785
        %v787 = vlaneseq
        %v788 = vshrl.u32 %v787, 7
        %v789 = vsub.s32 1, %v788
        %v790 = vrot.slane %v781, %v789
        %v793 = vadd.f32 %v777, %v786
        %v794 = vadd.f32 %v778, %v790
        %s795 = sld [smem:[#allocation8 + $0x27]]
        %v796 = vstv %s795
        %v797 = vmul.f32 %v369, %v796
        %v798 = vmul.f32 %v370, %v796
        %v799 = vadd.f32 %v793, %v797
        %v800 = vadd.f32 %v794, %v798
        %s801 = sld [smem:[#allocation8 + $0x28]]
        %v802 = vstv %s801
        %v803 = vmul.f32 %v391, %v802
        %v804 = vmul.f32 %v392, %v802
        %v805 = vadd.f32 %v799, %v803
        %v806 = vadd.f32 %v800, %v804
        %s807 = sld [smem:[#allocation8 + $0x29]]
        %v808 = vstv %s807
        %v809 = vmul.f32 %v413, %v808
        %v810 = vmul.f32 %v414, %v808
        %v811 = vadd.f32 %v805, %v809
        %v812 = vadd.f32 %v806, %v810
        %813 = vrot.lane.b32.xlu0 %v811, 96
        %v814 = vpop.permute.xlu0 %813
        %815 = vrot.lane.b32.xlu0 %v812, 96
        %v816 = vpop.permute.xlu0 %815
        %vm817 = vcmp.lt.s32.totalorder %v287, 96
        %v818 = vsel %vm817, %v814, %v816
        %v819 = vsel %vm817, %v816, %v814
        %s820 = scalar_lea.vmem [#allocation6], 20
        %v821 = vld [vmem:[%s820] ss:$8 sm:$0x3]
        %v823 = vlaneseq
        %v824 = vshrl.u32 %v823, 7
        %v825 = vsub.s32 0, %v824
        %v826 = vrot.slane %v821, %v825
        %v827 = vlaneseq
        %v828 = vshrl.u32 %v827, 7
        %v829 = vsub.s32 1, %v828
        %v830 = vrot.slane %v821, %v829
        %v833 = vmul.f32 %v818, %v826
        %v834 = vmul.f32 %v819, %v830
        %v835 = vadd.f32 %v761, %v833
        %v836 = vadd.f32 %v762, %v834
        %s837 = sld [smem:[#allocation8 + $0x2a]]
        %v838 = vstv %s837
        %v839 = vmul.f32 %v303, %v838
        %v840 = vmul.f32 %v304, %v838
        %s841 = sld [smem:[#allocation8 + $0x2b]]
        %v842 = vstv %s841
        %v843 = vmul.f32 %v325, %v842
        %v844 = vmul.f32 %v326, %v842
        %v845 = vadd.f32 %v839, %v843
        %v846 = vadd.f32 %v840, %v844
        %s847 = sld [smem:[#allocation8 + $0x2c]]
        %v848 = vstv %s847
        %v849 = vmul.f32 %v347, %v848
        %v850 = vmul.f32 %v348, %v848
        %v851 = vadd.f32 %v845, %v849
        %v852 = vadd.f32 %v846, %v850
        %s853 = sld [smem:[#allocation8 + $0x2d]]
        %v854 = vstv %s853
        %v855 = vmul.f32 %v269, %v854
        %v857 = vlaneseq
        %v858 = vshrl.u32 %v857, 7
        %v859 = vsub.s32 0, %v858
        %v860 = vrot.slane %v855, %v859
        %v861 = vlaneseq
        %v862 = vshrl.u32 %v861, 7
        %v863 = vsub.s32 1, %v862
        %v864 = vrot.slane %v855, %v863
        %v867 = vadd.f32 %v851, %v860
        %v868 = vadd.f32 %v852, %v864
        %s869 = sld [smem:[#allocation8 + $0x2e]]
        %v870 = vstv %s869
        %v871 = vmul.f32 %v369, %v870
        %v872 = vmul.f32 %v370, %v870
        %v873 = vadd.f32 %v867, %v871
        %v874 = vadd.f32 %v868, %v872
        %s875 = sld [smem:[#allocation8 + $0x2f]]
        %v876 = vstv %s875
        %v877 = vmul.f32 %v391, %v876
        %v878 = vmul.f32 %v392, %v876
        %v879 = vadd.f32 %v873, %v877
        %v880 = vadd.f32 %v874, %v878
        %s881 = sld [smem:[#allocation8 + $0x30]]
        %v882 = vstv %s881
        %v883 = vmul.f32 %v413, %v882
        %v884 = vmul.f32 %v414, %v882
        %v885 = vadd.f32 %v879, %v883
        %v886 = vadd.f32 %v880, %v884
        %887 = vrot.lane.b32.xlu0 %v885, 80
        %v888 = vpop.permute.xlu0 %887
        %889 = vrot.lane.b32.xlu0 %v886, 80
        %v890 = vpop.permute.xlu0 %889
        %vm891 = vcmp.lt.s32.totalorder %v287, 80
        %v892 = vsel %vm891, %v888, %v890
        %v893 = vsel %vm891, %v890, %v888
        %s894 = scalar_lea.vmem [#allocation6], 21
        %v895 = vld [vmem:[%s894] ss:$8 sm:$0x3]
        %v897 = vlaneseq
        %v898 = vshrl.u32 %v897, 7
        %v899 = vsub.s32 0, %v898
        %v900 = vrot.slane %v895, %v899
        %v901 = vlaneseq
        %v902 = vshrl.u32 %v901, 7
        %v903 = vsub.s32 1, %v902
        %v904 = vrot.slane %v895, %v903
        %v907 = vmul.f32 %v892, %v900
        %v908 = vmul.f32 %v893, %v904
        %v909 = vadd.f32 %v835, %v907
        %v910 = vadd.f32 %v836, %v908
        %v912 = vlaneseq
        %v913 = vshrl.u32 %v912, 7
        %v914 = vsub.s32 0, %v913
        %v915 = vrot.slane %v270, %v914
        %v916 = vlaneseq
        %v917 = vshrl.u32 %v916, 7
        %v918 = vsub.s32 1, %v917
        %v919 = vrot.slane %v270, %v918
        %922 = vrot.lane.b32.xlu0 %v915, 3
        %v923 = vpop.permute.xlu0 %922
        %924 = vrot.lane.b32.xlu0 %v919, 3
        %v925 = vpop.permute.xlu0 %924
        %v926 = vsel %vm288, %v923, %v925
        %v927 = vsel %vm288, %v925, %v923
        %v928 = vmul.f32 %v927, %v296
        %v929 = vmul.f32 %v926, %v300
        %930 = vrot.lane.b32.xlu0 %v915, 2
        %v931 = vpop.permute.xlu0 %930
        %932 = vrot.lane.b32.xlu0 %v919, 2
        %v933 = vpop.permute.xlu0 %932
        %v934 = vsel %vm309, %v931, %v933
        %v935 = vsel %vm309, %v933, %v931
        %v936 = vmul.f32 %v935, %v318
        %v937 = vmul.f32 %v934, %v322
        %938 = vrot.lane.b32.xlu0 %v915, 1
        %v939 = vpop.permute.xlu0 %938
        %940 = vrot.lane.b32.xlu0 %v919, 1
        %v941 = vpop.permute.xlu0 %940
        %v942 = vsel %vm331, %v939, %v941
        %v943 = vsel %vm331, %v941, %v939
        %v944 = vmul.f32 %v943, %v340
        %v945 = vmul.f32 %v942, %v344
        %946 = vrot.lane.b32.xlu0 %v915, 127
        %v947 = vpop.permute.xlu0 %946
        %948 = vrot.lane.b32.xlu0 %v919, 127
        %v949 = vpop.permute.xlu0 %948
        %v950 = vsel %vm353, %v947, %v949
        %v951 = vsel %vm353, %v949, %v947
        %v952 = vmul.f32 %v950, %v362
        %v953 = vmul.f32 %v951, %v366
        %954 = vrot.lane.b32.xlu0 %v915, 126
        %v955 = vpop.permute.xlu0 %954
        %956 = vrot.lane.b32.xlu0 %v919, 126
        %v957 = vpop.permute.xlu0 %956
        %v958 = vsel %vm375, %v955, %v957
        %v959 = vsel %vm375, %v957, %v955
        %v960 = vmul.f32 %v958, %v384
        %v961 = vmul.f32 %v959, %v388
        %962 = vrot.lane.b32.xlu0 %v915, 125
        %v963 = vpop.permute.xlu0 %962
        %964 = vrot.lane.b32.xlu0 %v919, 125
        %v965 = vpop.permute.xlu0 %964
        %v966 = vsel %vm397, %v963, %v965
        %v967 = vsel %vm397, %v965, %v963
        %v968 = vmul.f32 %v966, %v406
        %v969 = vmul.f32 %v967, %v410
        %s970 = sld [smem:[#allocation8 + $0x31]]
        %v971 = vstv %s970
        %v972 = vmul.f32 %v928, %v971
        %v973 = vmul.f32 %v929, %v971
        %s974 = sld [smem:[#allocation8 + $0x32]]
        %v975 = vstv %s974
        %v976 = vmul.f32 %v936, %v975
        %v977 = vmul.f32 %v937, %v975
        %v978 = vadd.f32 %v972, %v976
        %v979 = vadd.f32 %v973, %v977
        %s980 = sld [smem:[#allocation8 + $0x33]]
        %v981 = vstv %s980
        %v982 = vmul.f32 %v944, %v981
        %v983 = vmul.f32 %v945, %v981
        %v984 = vadd.f32 %v978, %v982
        %v985 = vadd.f32 %v979, %v983
        %s986 = sld [smem:[#allocation8 + $0x34]]
        %v987 = vstv %s986
        %v988 = vmul.f32 %v270, %v987
        %v990 = vlaneseq
        %v991 = vshrl.u32 %v990, 7
        %v992 = vsub.s32 0, %v991
        %v993 = vrot.slane %v988, %v992
        %v994 = vlaneseq
        %v995 = vshrl.u32 %v994, 7
        %v996 = vsub.s32 1, %v995
        %v997 = vrot.slane %v988, %v996
        %v1000 = vadd.f32 %v984, %v993
        %v1001 = vadd.f32 %v985, %v997
        %s1002 = sld [smem:[#allocation8 + $0x35]]
        %v1003 = vstv %s1002
        %v1004 = vmul.f32 %v952, %v1003
        %v1005 = vmul.f32 %v953, %v1003
        %v1006 = vadd.f32 %v1000, %v1004
        %v1007 = vadd.f32 %v1001, %v1005
        %s1008 = sld [smem:[#allocation8 + $0x36]]
        %v1009 = vstv %s1008
        %v1010 = vmul.f32 %v960, %v1009
        %v1011 = vmul.f32 %v961, %v1009
        %v1012 = vadd.f32 %v1006, %v1010
        %v1013 = vadd.f32 %v1007, %v1011
        %s1014 = sld [smem:[#allocation8 + $0x37]]
        %v1015 = vstv %s1014
        %v1016 = vmul.f32 %v968, %v1015
        %v1017 = vmul.f32 %v969, %v1015
        %v1018 = vadd.f32 %v1012, %v1016
        %v1019 = vadd.f32 %v1013, %v1017
        %1020 = vrot.lane.b32.xlu0 %v1018, 48
        %v1021 = vpop.permute.xlu0 %1020
        %1022 = vrot.lane.b32.xlu0 %v1019, 48
        %v1023 = vpop.permute.xlu0 %1022
        %v1024 = vsel %vm469, %v1021, %v1023
        %v1025 = vsel %vm469, %v1023, %v1021
        %v1026 = vmul.f32 %v1025, %v478
        %v1027 = vmul.f32 %v1024, %v482
        %v1028 = vadd.f32 %v909, %v1026
        %v1029 = vadd.f32 %v910, %v1027
        %s1030 = sld [smem:[#allocation8 + $0x38]]
        %v1031 = vstv %s1030
        %v1032 = vmul.f32 %v928, %v1031
        %v1033 = vmul.f32 %v929, %v1031
        %s1034 = sld [smem:[#allocation8 + $0x39]]
        %v1035 = vstv %s1034
        %v1036 = vmul.f32 %v936, %v1035
        %v1037 = vmul.f32 %v937, %v1035
        %v1038 = vadd.f32 %v1032, %v1036
        %v1039 = vadd.f32 %v1033, %v1037
        %s1040 = sld [smem:[#allocation8 + $0x3a]]
        %v1041 = vstv %s1040
        %v1042 = vmul.f32 %v944, %v1041
        %v1043 = vmul.f32 %v945, %v1041
        %v1044 = vadd.f32 %v1038, %v1042
        %v1045 = vadd.f32 %v1039, %v1043
        %s1046 = sld [smem:[#allocation8 + $0x3b]]
        %v1047 = vstv %s1046
        %v1048 = vmul.f32 %v270, %v1047
        %v1050 = vlaneseq
        %v1051 = vshrl.u32 %v1050, 7
        %v1052 = vsub.s32 0, %v1051
        %v1053 = vrot.slane %v1048, %v1052
        %v1054 = vlaneseq
        %v1055 = vshrl.u32 %v1054, 7
        %v1056 = vsub.s32 1, %v1055
        %v1057 = vrot.slane %v1048, %v1056
        %v1060 = vadd.f32 %v1044, %v1053
        %v1061 = vadd.f32 %v1045, %v1057
        %s1062 = sld [smem:[#allocation8 + $0x3c]]
        %v1063 = vstv %s1062
        %v1064 = vmul.f32 %v952, %v1063
        %v1065 = vmul.f32 %v953, %v1063
        %v1066 = vadd.f32 %v1060, %v1064
        %v1067 = vadd.f32 %v1061, %v1065
        %s1068 = sld [smem:[#allocation8 + $0x3d]]
        %v1069 = vstv %s1068
        %v1070 = vmul.f32 %v960, %v1069
        %v1071 = vmul.f32 %v961, %v1069
        %v1072 = vadd.f32 %v1066, %v1070
        %v1073 = vadd.f32 %v1067, %v1071
        %s1074 = sld [smem:[#allocation8 + $0x3e]]
        %v1075 = vstv %s1074
        %v1076 = vmul.f32 %v968, %v1075
        %v1077 = vmul.f32 %v969, %v1075
        %v1078 = vadd.f32 %v1072, %v1076
        %v1079 = vadd.f32 %v1073, %v1077
        %1080 = vrot.lane.b32.xlu0 %v1078, 32
        %v1081 = vpop.permute.xlu0 %1080
        %1082 = vrot.lane.b32.xlu0 %v1079, 32
        %v1083 = vpop.permute.xlu0 %1082
        %v1084 = vsel %vm543, %v1081, %v1083
        %v1085 = vsel %vm543, %v1083, %v1081
        %v1086 = vmul.f32 %v1085, %v552
        %v1087 = vmul.f32 %v1084, %v556
        %v1088 = vadd.f32 %v1028, %v1086
        %v1089 = vadd.f32 %v1029, %v1087
        %s1090 = sld [smem:[#allocation8 + $0x3f]]
        %v1091 = vstv %s1090
        %v1092 = vmul.f32 %v928, %v1091
        %v1093 = vmul.f32 %v929, %v1091
        %s1094 = sld [smem:[#allocation8 + $0x40]]
        %v1095 = vstv %s1094
        %v1096 = vmul.f32 %v936, %v1095
        %v1097 = vmul.f32 %v937, %v1095
        %v1098 = vadd.f32 %v1092, %v1096
        %v1099 = vadd.f32 %v1093, %v1097
        %s1100 = sld [smem:[#allocation8 + $0x41]]
        %v1101 = vstv %s1100
        %v1102 = vmul.f32 %v944, %v1101
        %v1103 = vmul.f32 %v945, %v1101
        %v1104 = vadd.f32 %v1098, %v1102
        %v1105 = vadd.f32 %v1099, %v1103
        %s1106 = sld [smem:[#allocation8 + $0x42]]
        %v1107 = vstv %s1106
        %v1108 = vmul.f32 %v270, %v1107
        %v1110 = vlaneseq
        %v1111 = vshrl.u32 %v1110, 7
        %v1112 = vsub.s32 0, %v1111
        %v1113 = vrot.slane %v1108, %v1112
        %v1114 = vlaneseq
        %v1115 = vshrl.u32 %v1114, 7
        %v1116 = vsub.s32 1, %v1115
        %v1117 = vrot.slane %v1108, %v1116
        %v1120 = vadd.f32 %v1104, %v1113
        %v1121 = vadd.f32 %v1105, %v1117
        %s1122 = sld [smem:[#allocation8 + $0x43]]
        %v1123 = vstv %s1122
        %v1124 = vmul.f32 %v952, %v1123
        %v1125 = vmul.f32 %v953, %v1123
        %v1126 = vadd.f32 %v1120, %v1124
        %v1127 = vadd.f32 %v1121, %v1125
        %s1128 = sld [smem:[#allocation8 + $0x44]]
        %v1129 = vstv %s1128
        %v1130 = vmul.f32 %v960, %v1129
        %v1131 = vmul.f32 %v961, %v1129
        %v1132 = vadd.f32 %v1126, %v1130
        %v1133 = vadd.f32 %v1127, %v1131
        %s1134 = sld [smem:[#allocation8 + $0x45]]
        %v1135 = vstv %s1134
        %v1136 = vmul.f32 %v968, %v1135
        %v1137 = vmul.f32 %v969, %v1135
        %v1138 = vadd.f32 %v1132, %v1136
        %v1139 = vadd.f32 %v1133, %v1137
        %1140 = vrot.lane.b32.xlu0 %v1138, 16
        %v1141 = vpop.permute.xlu0 %1140
        %1142 = vrot.lane.b32.xlu0 %v1139, 16
        %v1143 = vpop.permute.xlu0 %1142
        %v1144 = vsel %vm617, %v1141, %v1143
        %v1145 = vsel %vm617, %v1143, %v1141
        %v1146 = vmul.f32 %v1145, %v626
        %v1147 = vmul.f32 %v1144, %v630
        %v1148 = vadd.f32 %v1088, %v1146
        %v1149 = vadd.f32 %v1089, %v1147
        %s1150 = sld [smem:[#allocation8 + $0x46]]
        %v1151 = vstv %s1150
        %v1152 = vmul.f32 %v928, %v1151
        %v1153 = vmul.f32 %v929, %v1151
        %s1154 = sld [smem:[#allocation8 + $0x47]]
        %v1155 = vstv %s1154
        %v1156 = vmul.f32 %v936, %v1155
        %v1157 = vmul.f32 %v937, %v1155
        %v1158 = vadd.f32 %v1152, %v1156
        %v1159 = vadd.f32 %v1153, %v1157
        %s1160 = sld [smem:[#allocation8 + $0x48]]
        %v1161 = vstv %s1160
        %v1162 = vmul.f32 %v944, %v1161
        %v1163 = vmul.f32 %v945, %v1161
        %v1164 = vadd.f32 %v1158, %v1162
        %v1165 = vadd.f32 %v1159, %v1163
        %s1166 = sld [smem:[#allocation8 + $0x49]]
        %v1167 = vstv %s1166
        %v1168 = vmul.f32 %v270, %v1167
        %v1170 = vlaneseq
        %v1171 = vshrl.u32 %v1170, 7
        %v1172 = vsub.s32 0, %v1171
        %v1173 = vrot.slane %v1168, %v1172
        %v1174 = vlaneseq
        %v1175 = vshrl.u32 %v1174, 7
        %v1176 = vsub.s32 1, %v1175
        %v1177 = vrot.slane %v1168, %v1176
        %v1180 = vadd.f32 %v1164, %v1173
        %v1181 = vadd.f32 %v1165, %v1177
        %s1182 = sld [smem:[#allocation8 + $0x4a]]
        %v1183 = vstv %s1182
        %v1184 = vmul.f32 %v952, %v1183
        %v1185 = vmul.f32 %v953, %v1183
        %v1186 = vadd.f32 %v1180, %v1184
        %v1187 = vadd.f32 %v1181, %v1185
        %s1188 = sld [smem:[#allocation8 + $0x4b]]
        %v1189 = vstv %s1188
        %v1190 = vmul.f32 %v960, %v1189
        %v1191 = vmul.f32 %v961, %v1189
        %v1192 = vadd.f32 %v1186, %v1190
        %v1193 = vadd.f32 %v1187, %v1191
        %s1194 = sld [smem:[#allocation8 + $0x4c]]
        %v1195 = vstv %s1194
        %v1196 = vmul.f32 %v968, %v1195
        %v1197 = vmul.f32 %v969, %v1195
        %v1198 = vadd.f32 %v1192, %v1196
        %v1199 = vadd.f32 %v1193, %v1197
        %v1200 = vadd.f32 %v1148, %v1198
        %v1201 = vadd.f32 %v1149, %v1199
        %s1202 = sld [smem:[#allocation8 + $0x4d]]
        %v1203 = vstv %s1202
        %v1204 = vmul.f32 %v928, %v1203
        %v1205 = vmul.f32 %v929, %v1203
        %s1206 = sld [smem:[#allocation8 + $0x4e]]
        %v1207 = vstv %s1206
        %v1208 = vmul.f32 %v936, %v1207
        %v1209 = vmul.f32 %v937, %v1207
        %v1210 = vadd.f32 %v1204, %v1208
        %v1211 = vadd.f32 %v1205, %v1209
        %s1212 = sld [smem:[#allocation8 + $0x4f]]
        %v1213 = vstv %s1212
        %v1214 = vmul.f32 %v944, %v1213
        %v1215 = vmul.f32 %v945, %v1213
        %v1216 = vadd.f32 %v1210, %v1214
        %v1217 = vadd.f32 %v1211, %v1215
        %s1218 = sld [smem:[#allocation8 + $0x50]]
        %v1219 = vstv %s1218
        %v1220 = vmul.f32 %v270, %v1219
        %v1222 = vlaneseq
        %v1223 = vshrl.u32 %v1222, 7
        %v1224 = vsub.s32 0, %v1223
        %v1225 = vrot.slane %v1220, %v1224
        %v1226 = vlaneseq
        %v1227 = vshrl.u32 %v1226, 7
        %v1228 = vsub.s32 1, %v1227
        %v1229 = vrot.slane %v1220, %v1228
        %v1232 = vadd.f32 %v1216, %v1225
        %v1233 = vadd.f32 %v1217, %v1229
        %s1234 = sld [smem:[#allocation8 + $0x51]]
        %v1235 = vstv %s1234
        %v1236 = vmul.f32 %v952, %v1235
        %v1237 = vmul.f32 %v953, %v1235
        %v1238 = vadd.f32 %v1232, %v1236
        %v1239 = vadd.f32 %v1233, %v1237
        %s1240 = sld [smem:[#allocation8 + $0x52]]
        %v1241 = vstv %s1240
        %v1242 = vmul.f32 %v960, %v1241
        %v1243 = vmul.f32 %v961, %v1241
        %v1244 = vadd.f32 %v1238, %v1242
        %v1245 = vadd.f32 %v1239, %v1243
        %s1246 = sld [smem:[#allocation8 + $0x53]]
        %v1247 = vstv %s1246
        %v1248 = vmul.f32 %v968, %v1247
        %v1249 = vmul.f32 %v969, %v1247
        %v1250 = vadd.f32 %v1244, %v1248
        %v1251 = vadd.f32 %v1245, %v1249
        %1252 = vrot.lane.b32.xlu0 %v1250, 112
        %v1253 = vpop.permute.xlu0 %1252
        %1254 = vrot.lane.b32.xlu0 %v1251, 112
        %v1255 = vpop.permute.xlu0 %1254
        %v1256 = vsel %vm743, %v1253, %v1255
        %v1257 = vsel %vm743, %v1255, %v1253
        %v1258 = vmul.f32 %v1256, %v752
        %v1259 = vmul.f32 %v1257, %v756
        %v1260 = vadd.f32 %v1200, %v1258
        %v1261 = vadd.f32 %v1201, %v1259
        %s1262 = sld [smem:[#allocation8 + $0x54]]
        %v1263 = vstv %s1262
        %v1264 = vmul.f32 %v928, %v1263
        %v1265 = vmul.f32 %v929, %v1263
        %s1266 = sld [smem:[#allocation8 + $0x55]]
        %v1267 = vstv %s1266
        %v1268 = vmul.f32 %v936, %v1267
        %v1269 = vmul.f32 %v937, %v1267
        %v1270 = vadd.f32 %v1264, %v1268
        %v1271 = vadd.f32 %v1265, %v1269
        %s1272 = sld [smem:[#allocation8 + $0x56]]
        %v1273 = vstv %s1272
        %v1274 = vmul.f32 %v944, %v1273
        %v1275 = vmul.f32 %v945, %v1273
        %v1276 = vadd.f32 %v1270, %v1274
        %v1277 = vadd.f32 %v1271, %v1275
        %s1278 = sld [smem:[#allocation8 + $0x57]]
        %v1279 = vstv %s1278
        %v1280 = vmul.f32 %v270, %v1279
        %v1282 = vlaneseq
        %v1283 = vshrl.u32 %v1282, 7
        %v1284 = vsub.s32 0, %v1283
        %v1285 = vrot.slane %v1280, %v1284
        %v1286 = vlaneseq
        %v1287 = vshrl.u32 %v1286, 7
        %v1288 = vsub.s32 1, %v1287
        %v1289 = vrot.slane %v1280, %v1288
        %v1292 = vadd.f32 %v1276, %v1285
        %v1293 = vadd.f32 %v1277, %v1289
        %s1294 = sld [smem:[#allocation8 + $0x58]]
        %v1295 = vstv %s1294
        %v1296 = vmul.f32 %v952, %v1295
        %v1297 = vmul.f32 %v953, %v1295
        %v1298 = vadd.f32 %v1292, %v1296
        %v1299 = vadd.f32 %v1293, %v1297
        %s1300 = sld [smem:[#allocation8 + $0x59]]
        %v1301 = vstv %s1300
        %v1302 = vmul.f32 %v960, %v1301
        %v1303 = vmul.f32 %v961, %v1301
        %v1304 = vadd.f32 %v1298, %v1302
        %v1305 = vadd.f32 %v1299, %v1303
        %s1306 = sld [smem:[#allocation8 + $0x5a]]
        %v1307 = vstv %s1306
        %v1308 = vmul.f32 %v968, %v1307
        %v1309 = vmul.f32 %v969, %v1307
        %v1310 = vadd.f32 %v1304, %v1308
        %v1311 = vadd.f32 %v1305, %v1309
        %1312 = vrot.lane.b32.xlu0 %v1310, 96
        %v1313 = vpop.permute.xlu0 %1312
        %1314 = vrot.lane.b32.xlu0 %v1311, 96
        %v1315 = vpop.permute.xlu0 %1314
        %v1316 = vsel %vm817, %v1313, %v1315
        %v1317 = vsel %vm817, %v1315, %v1313
        %v1318 = vmul.f32 %v1316, %v826
        %v1319 = vmul.f32 %v1317, %v830
        %v1320 = vadd.f32 %v1260, %v1318
        %v1321 = vadd.f32 %v1261, %v1319
        %s1322 = sld [smem:[#allocation8 + $0x5b]]
        %v1323 = vstv %s1322
        %v1324 = vmul.f32 %v928, %v1323
        %v1325 = vmul.f32 %v929, %v1323
        %s1326 = sld [smem:[#allocation8 + $0x5c]]
        %v1327 = vstv %s1326
        %v1328 = vmul.f32 %v936, %v1327
        %v1329 = vmul.f32 %v937, %v1327
        %v1330 = vadd.f32 %v1324, %v1328
        %v1331 = vadd.f32 %v1325, %v1329
        %s1332 = sld [smem:[#allocation8 + $0x5d]]
        %v1333 = vstv %s1332
        %v1334 = vmul.f32 %v944, %v1333
        %v1335 = vmul.f32 %v945, %v1333
        %v1336 = vadd.f32 %v1330, %v1334
        %v1337 = vadd.f32 %v1331, %v1335
        %s1338 = sld [smem:[#allocation8 + $0x5e]]
        %v1339 = vstv %s1338
        %v1340 = vmul.f32 %v270, %v1339
        %v1342 = vlaneseq
        %v1343 = vshrl.u32 %v1342, 7
        %v1344 = vsub.s32 0, %v1343
        %v1345 = vrot.slane %v1340, %v1344
        %v1346 = vlaneseq
        %v1347 = vshrl.u32 %v1346, 7
        %v1348 = vsub.s32 1, %v1347
        %v1349 = vrot.slane %v1340, %v1348
        %v1352 = vadd.f32 %v1336, %v1345
        %v1353 = vadd.f32 %v1337, %v1349
        %s1354 = sld [smem:[#allocation8 + $0x5f]]
        %v1355 = vstv %s1354
        %v1356 = vmul.f32 %v952, %v1355
        %v1357 = vmul.f32 %v953, %v1355
        %v1358 = vadd.f32 %v1352, %v1356
        %v1359 = vadd.f32 %v1353, %v1357
        %s1360 = sld [smem:[#allocation8 + $0x60]]
        %v1361 = vstv %s1360
        %v1362 = vmul.f32 %v960, %v1361
        %v1363 = vmul.f32 %v961, %v1361
        %v1364 = vadd.f32 %v1358, %v1362
        %v1365 = vadd.f32 %v1359, %v1363
        %s1366 = sld [smem:[#allocation8 + $0x61]]
        %v1367 = vstv %s1366
        %v1368 = vmul.f32 %v968, %v1367
        %v1369 = vmul.f32 %v969, %v1367
        %v1370 = vadd.f32 %v1364, %v1368
        %v1371 = vadd.f32 %v1365, %v1369
        %1372 = vrot.lane.b32.xlu0 %v1370, 80
        %v1373 = vpop.permute.xlu0 %1372
        %1374 = vrot.lane.b32.xlu0 %v1371, 80
        %v1375 = vpop.permute.xlu0 %1374
        %v1376 = vsel %vm891, %v1373, %v1375
        %v1377 = vsel %vm891, %v1375, %v1373
        %v1378 = vmul.f32 %v1376, %v900
        %v1379 = vmul.f32 %v1377, %v904
        %v1380 = vadd.f32 %v1320, %v1378
        %v1381 = vadd.f32 %v1321, %v1379
        %v1382 = vstv %s256
        %v1383 = vmul.f32 %v1380, %v1382
        %v1384 = vmul.f32 %v1381, %v1382
        %v1385 = vstv %s257
        %v1386 = vadd.f32 %v1383, %v1385
        %v1387 = vadd.f32 %v1384, %v1385
        %v1388 = vand.u32 2147483647, %v1386
        %v1389 = vand.u32 2147483647, %v1387
        %v1390 = vsub.f32 0.0, %v1388
        %v1391 = vsub.f32 0.0, %v1389
        %v1392 = vmul.f32 %v1390, 1.442695
        %v1393 = vpow.pop %v1392
        %v1394 = vmul.f32 %v1391, 1.442695
        %v1395 = vpow.pop %v1394
        %vm1396 = vcmp.ge.f32.partialorder %v1386, 0.0
        %vm1397 = vcmp.ge.f32.partialorder %v1387, 0.0
        %v1398 = vsel %vm1396, 1.0, %v1393
        %v1399 = vsel %vm1397, 1.0, %v1395
        %v1400 = vadd.f32 %v1393, 1.0
        %v1401 = vadd.f32 %v1395, 1.0
        %v1402 = vrcp.pop %v1400
        %v1403 = vmul.f32 %v1398, %v1402
        %v1404 = vrcp.pop %v1401
        %v1405 = vmul.f32 %v1399, %v1404
        %v1408 = vcombine.low %v1403, %v1405
        %v1410 = vunpack.c.l.s4 1966171168
        %v1411 = vunpack.c.0.s8 %v1410
        %v1412 = vlaneseq
        %v1413 = vshrl.u32 %v1412, 7
        %v1414 = vsub.s32 %v1411, %v1413
        %v1415 = vrot.slane %v1408, %v1414
        %v1417 = vunpack.c.l.s4 1966171168
        %v1418 = vunpack.c.0.s8 %v1417
        %v1419 = vlaneseq
        %v1420 = vshrl.u32 %v1419, 7
        %v1421 = vsub.s32 %v1418, %v1420
        %v1422 = vrot.slane %v1415, %v1421
        %v1424 = vmul.f32 %v258, %v1422
        %v1425 = vlaneseq
        %vm1426 = vcmp.ge.s32.totalorder %v1425, 0
        %vm1427 = vcmp.lt.s32.totalorder %v1425, 256
        %vm1428 = vmand %vm1426, %vm1427
        %1429 = vst.msk [vmem:[%s255] ss:$4 sm:$0x3] %vm1428, %v1424
        %v1430 = vld [vmem:[%s259] ss:$4 sm:$0x3]
        %v1431 = vmul.f32 %v1430, %v1422
        %s1432 = scalar_lea.vmem %s255, 1 [#allocation11]
        %1433 = vst.msk [vmem:[%s1432] ss:$4 sm:$0x3] %vm1428, %v1431
        %v1434 = vld [vmem:[%s263] ss:$4 sm:$0x3]
        %v1435 = vmul.f32 %v1434, %v1422
        %s1436 = scalar_lea.vmem %s255, 2 [#allocation11]
        %1437 = vst.msk [vmem:[%s1436] ss:$4 sm:$0x3] %vm1428, %v1435
        %v1438 = vld [vmem:[%s267] ss:$4 sm:$0x3]
        %v1439 = vmul.f32 %v1438, %v1422
        %s1440 = scalar_lea.vmem %s255, 3 [#allocation11]
        %1441 = vst.msk [vmem:[%s1440] ss:$4 sm:$0x3] %vm1428, %v1439
        %s1442 = sand.u32 %s121, 1
        %s1443 = scalar_lea.sflag [#allocation4], %s1442
        %s1444 = sand.u32 %s121, 1
        %s1445 = smul.addr %s1444, 8
        %s1446 = scalar_lea.vmem [#allocation11], %s1445
        // Predicated region
        $region53: #{tpu_custom_call.1} parent=35 // pred_check
          %p1447 = pneg %p131
        $region54: #{tpu_custom_call.1} parent=35 // pred_check_branch
          %1449 = sbr.rel (%p1447) target = $region56
        $region55: #{tpu_custom_call.1} parent=35 // pred_region
          %s1451 = ssub.s32 128, 128
          %1452 = vsyncadd %s1443, %s1451
          %s1453 = smul.addr %s24, 2
          %s1454 = smul.addr %s1453, 64
          %s1455 = scalar_lea.hbm %s4, %s1454
          %s1457 = sshll.u32 %s1446, 4
          %s1458 = int_to_ptr.vmem [resolvable:$true] %s1457
          %1460 = dma.vmem_to_hbm [thread:$0]  %s1458, 128, %s1455, %s1443
        $region56: #{tpu_custom_call.1} parent=35 // pred_fallthru
          _
      $region36: #{tpu_custom_call.1} parent=5 // pred_fallthru
        _
      %p1461 = scmp.le.s32.totalorder 2, %s19
      // Predicated region
      $region57: #{tpu_custom_call.1} parent=5 // pred_check
        %p1462 = pneg %p1461
      $region58: #{tpu_custom_call.1} parent=5 // pred_check_branch
        %1464 = sbr.rel (%p1462) target = $region60
      $region59: #{tpu_custom_call.1} parent=5 // pred_region
        %s1465 = ssub.s32 %s19, 2
        // Predicated region
        $region61: #{tpu_custom_call.1} parent=59 // pred_check
          %p1466 = pneg %p137
        $region62: #{tpu_custom_call.1} parent=59 // pred_check_branch
          %1468 = sbr.rel (%p1466) target = $region64
        $region63: #{tpu_custom_call.1} parent=59 // pred_region
          %s1469 = sand.u32 %s122, 1
          %s1470 = scalar_lea.sflag [#allocation4], %s1469
          %s1471 = sand.u32 %s122, 1
          %s1472 = smul.addr %s1471, 8
          %s1473 = scalar_lea.vmem [#allocation11], %s1472
          %1474 = dma.done %s1470, 128
        $region64: #{tpu_custom_call.1} parent=59 // pred_fallthru
          _
      $region60: #{tpu_custom_call.1} parent=5 // pred_fallthru
        _
    $region6: #{tpu_custom_call.1} parent=1 // loop_footer
      %s23 = sadd.s32 1, %s19
    $region7: #{tpu_custom_call.1} parent=1 // loop_footer_branch
      %18 = sbr.rel target = $region3
    $region8: #{tpu_custom_call.1} parent=1 // loop_exit
      _
    %1475 = vsyncpa [#allocation3], 1
    %s1476 = scalar_lea.sflag [#allocation3], 1
    %1477 = vsyncpa %s1476, 1
    %1478 = vsyncpa [#allocation7], 1
    %1479 = vsyncpa [#allocation4], 1
    %s1480 = scalar_lea.sflag [#allocation4], 1
    %1481 = vsyncpa %s1480, 1
    %1482 = vsyncpa [#allocation5], 1
    %s1483 = scalar_lea.sflag [#allocation5], 1
    %1484 = vsyncpa %s1483, 1
    %1485 = vsyncpa [#allocation10], 1

</llo_original>
